<compile_context>
chip_gen: v7x
topology: tpu7x:2x2x1
jax: 0.10.0
libtpu: 0.0.40
codegen_flags: <defaults>
</compile_context>

<pallas_src>
import jax
import jax.numpy as jnp
from jax import lax
from jax.experimental import pallas as pl
from jax.experimental.pallas import tpu as pltpu

EPS = 1e-5


# ---------------------------------------------------------------------------
# Fused kernel: BN1 -> ReLU -> conv1(s=1,p=1) -> BN2 -> ReLU -> conv2(s=2,p=1)
# One batch element per grid step.  All spatial data is kept W-parity-folded:
#   folded[h, jf, q*C + c] == plain[h, 2*jf + q, c]
# ---------------------------------------------------------------------------
def _downsample_fused_kernel(xf_ref, s1_ref, b1_ref, w1_ref, s2_ref, b2_ref,
                             w2_ref, o_ref, apf_ref, p2f_ref):
    _, H, Wf, C2in = xf_ref.shape          # Wf == W // 2, C2in == 2*Cin
    Cin = C2in // 2
    C2mid = s2_ref.shape[-1]               # 2*Cmid
    Cmid = C2mid // 2
    _, Ho, Wo, Cout = o_ref.shape          # Ho == H//2, Wo == W//2 (== Wf)
    f32 = jnp.float32

    # ------------------- BN1 + ReLU (f32 VPU math) --------------------------
    a = jnp.maximum(xf_ref[...].astype(f32) * s1_ref[...] + b1_ref[...], 0.0)
    a = a[0]                                                # (H, Wf, 2*Cin)

    # ---- stage-1 padded + folded activation scratch (apf) ------------------
    # apf[i, jf, q*Cin + c] == zero-padded relu(bn1(x))[i-1, 2*jf + q - 1, c]
    # Zero only the 1-px border strips; interior is fully rewritten each step.
    apf_ref[0:1, :, :] = jnp.zeros((1, Wf + 1, C2in), f32)
    apf_ref[H + 1:H + 2, :, :] = jnp.zeros((1, Wf + 1, C2in), f32)
    apf_ref[1:H + 1, 0:1, 0:Cin] = jnp.zeros((H, 1, Cin), f32)
    apf_ref[1:H + 1, Wf:Wf + 1, Cin:C2in] = jnp.zeros((H, 1, Cin), f32)
    apf_ref[1:H + 1, 0:Wf, Cin:C2in] = a[:, :, 0:Cin]
    apf_ref[1:H + 1, 1:Wf + 1, 0:Cin] = a[:, :, Cin:C2in]

    # ---- conv1: 3x3 / stride 1 / pad 1 as ONE im2col matmul (K = 12*Cin) ---
    # patch channel block (kh, joff) <- apf[kh:kh+H, joff:joff+Wf, :]
    pieces = []
    for kh in range(3):
        for joff in range(2):
            pieces.append(apf_ref[kh:kh + H, joff:joff + Wf, :])
    patch1 = jnp.concatenate(pieces, axis=-1)               # (H, Wf, 12*Cin) f32
    patch1 = patch1.reshape(H * Wf, 6 * C2in).astype(jnp.bfloat16)
    y = jnp.dot(patch1, w1_ref[...],
                preferred_element_type=jnp.float32)         # (H*Wf, 2*Cmid) f32

    # ------------------- BN2 + ReLU (f32) -----------------------------------
    y = jnp.maximum(y * s2_ref[...] + b2_ref[...], 0.0)
    y = y.reshape(H, Wf, C2mid)                             # folded stage-1 out

    # ---- stage-2 padded + folded activation scratch (p2f) ------------------
    p2f_ref[0:1, :, :] = jnp.zeros((1, Wo + 1, C2mid), f32)
    p2f_ref[H + 1:H + 2, :, :] = jnp.zeros((1, Wo + 1, C2mid), f32)
    p2f_ref[1:H + 1, 0:1, 0:Cmid] = jnp.zeros((H, 1, Cmid), f32)
    p2f_ref[1:H + 1, Wo:Wo + 1, Cmid:C2mid] = jnp.zeros((H, 1, Cmid), f32)
    p2f_ref[1:H + 1, 0:Wo, Cmid:C2mid] = y[:, :, 0:Cmid]
    p2f_ref[1:H + 1, 1:Wo + 1, 0:Cmid] = y[:, :, Cmid:C2mid]

    # ---- conv2: 3x3 / stride 2 / pad 1 as ONE im2col matmul (K = 12*Cmid) --
    # Row stride 2: free leading-dim split of the padded scratch.
    # Col stride 2: already folded into the channel (lane) dimension.
    p2 = p2f_ref[...].reshape(Ho + 1, 2, Wo + 1, C2mid)
    pieces = []
    for kh in range(3):
        rows = p2[kh // 2:kh // 2 + Ho, kh % 2]             # (Ho, Wo+1, 2*Cmid)
        pieces.append(rows[:, 0:Wo, :])
        pieces.append(rows[:, 1:Wo + 1, :])
    patch2 = jnp.concatenate(pieces, axis=-1)               # (Ho, Wo, 12*Cmid)
    patch2 = patch2.reshape(Ho * Wo, 6 * C2mid).astype(jnp.bfloat16)
    out = jnp.dot(patch2, w2_ref[...],
                  preferred_element_type=jnp.float32)       # (Ho*Wo, Cout) f32
    o_ref[...] = out.reshape(1, Ho, Wo, Cout)


# ---------------------------------------------------------------------------
# Weight packing (wrapper-side, one-time): im2col weights for the folded layout
# ---------------------------------------------------------------------------
def _pack_conv1_weights(w1):
    # (3, 3, Cin, Cmid) -> (12*Cin, 2*Cmid); output col block qq is the output
    # W-parity; tap kw of output parity qq reads folded block (joff, q) with
    # joff = (qq+kw)//2, q = (qq+kw)%2.
    _, _, Cin, Cmid = w1.shape
    w = jnp.zeros((3, 2, 2, Cin, 2, Cmid), w1.dtype)   # [kh, joff, q, ci, qq, co]
    for kh in range(3):
        for qq in range(2):
            for kw in range(3):
                joff, q = divmod(qq + kw, 2)
                w = w.at[kh, joff, q, :, qq, :].set(w1[kh, kw])
    return w.reshape(12 * Cin, 2 * Cmid)


def _pack_conv2_weights(w2):
    # (3, 3, Cmid, Cout) -> (12*Cmid, Cout); stride-2 tap kw reads folded block
    # joff = kw//2, q = kw%2 (block (1,1) stays zero).
    _, _, Cmid, Cout = w2.shape
    w = jnp.zeros((3, 2, 2, Cmid, Cout), w2.dtype)     # [kh, joff, q, ci, co]
    for kh in range(3):
        for kw in range(3):
            joff, q = divmod(kw, 2)
            w = w.at[kh, joff, q, :, :].set(w2[kh, kw])
    return w.reshape(12 * Cmid, Cout)


def _bn_scale_bias(gamma, beta, mean, var):
    scale = gamma / jnp.sqrt(var + EPS)
    bias = beta - mean * scale
    return scale, bias


# ---------------------------------------------------------------------------
# Public wrapper (NCHW in / NCHW out, matching the PyTorch module)
# ---------------------------------------------------------------------------
def downsample_forward(x_nchw, params, stride=2):
    (g1, be1, m1, v1, w1_hwio, g2, be2, m2, v2, w2_hwio) = params
    assert stride == 2
    N, Cin, H, W = x_nchw.shape
    assert H % 2 == 0 and W % 2 == 0
    Cmid = w1_hwio.shape[-1]
    Cout = w2_hwio.shape[-1]
    Ho, Wo = H // 2, W // 2
    Wf = W // 2

    # NCHW -> NHWC, fold W parity into channels, cast to bf16 for the DMA.
    # (If the surrounding model stayed NHWC these transposes would disappear.)
    x = jnp.transpose(x_nchw, (0, 2, 3, 1))
    xf = x.reshape(N, H, Wf, 2 * Cin).astype(jnp.bfloat16)

    s1, b1 = _bn_scale_bias(g1, be1, m1, v1)
    s2, b2 = _bn_scale_bias(g2, be2, m2, v2)
    s1f = jnp.tile(s1, 2).reshape(1, 2 * Cin).astype(jnp.float32)
    b1f = jnp.tile(b1, 2).reshape(1, 2 * Cin).astype(jnp.float32)
    s2f = jnp.tile(s2, 2).reshape(1, 2 * Cmid).astype(jnp.float32)
    b2f = jnp.tile(b2, 2).reshape(1, 2 * Cmid).astype(jnp.float32)

    w1p = _pack_conv1_weights(w1_hwio).astype(jnp.bfloat16)   # (12*Cin, 2*Cmid)
    w2p = _pack_conv2_weights(w2_hwio).astype(jnp.bfloat16)   # (12*Cmid, Cout)

    out = pl.pallas_call(
        _downsample_fused_kernel,
        out_shape=jax.ShapeDtypeStruct((N, Ho, Wo, Cout), jnp.float32),
        grid=(N,),
        in_specs=[
            pl.BlockSpec((1, H, Wf, 2 * Cin), lambda n: (n, 0, 0, 0)),
            pl.BlockSpec((1, 2 * Cin), lambda n: (0, 0)),
            pl.BlockSpec((1, 2 * Cin), lambda n: (0, 0)),
            pl.BlockSpec((12 * Cin, 2 * Cmid), lambda n: (0, 0)),
            pl.BlockSpec((1, 2 * Cmid), lambda n: (0, 0)),
            pl.BlockSpec((1, 2 * Cmid), lambda n: (0, 0)),
            pl.BlockSpec((12 * Cmid, Cout), lambda n: (0, 0)),
        ],
        out_specs=pl.BlockSpec((1, Ho, Wo, Cout), lambda n: (n, 0, 0, 0)),
        scratch_shapes=[
            pltpu.VMEM((H + 2, Wf + 1, 2 * Cin), jnp.float32),   # padded stage-1 act
            pltpu.VMEM((H + 2, Wo + 1, 2 * Cmid), jnp.float32),  # padded stage-2 act
        ],
        compiler_params=pltpu.CompilerParams(
            dimension_semantics=("parallel",),
            vmem_limit_bytes=32 * 1024 * 1024,
        ),
    )(xf, s1f, b1f, w1p, s2f, b2f, w2p)

    return jnp.transpose(out, (0, 3, 1, 2))  # NHWC -> NCHW


# ---------------------------------------------------------------------------
# Pure-JAX reference (for correctness check)
# ---------------------------------------------------------------------------
def reference_forward(x_nchw, params, stride=2):
    (g1, be1, m1, v1, w1_hwio, g2, be2, m2, v2, w2_hwio) = params

    def bn(x, g, b, m, v):
        inv = 1.0 / jnp.sqrt(v + EPS)
        return (x - m[None, :, None, None]) * inv[None, :, None, None] \
            * g[None, :, None, None] + b[None, :, None, None]

    w1 = jnp.transpose(w1_hwio, (3, 2, 0, 1))  # HWIO -> OIHW
    w2 = jnp.transpose(w2_hwio, (3, 2, 0, 1))
    y = jnp.maximum(bn(x_nchw, g1, be1, m1, v1), 0.0)
    y = lax.conv_general_dilated(y, w1, (1, 1), ((1, 1), (1, 1)),
                                 dimension_numbers=('NCHW', 'OIHW', 'NCHW'),
                                 precision=lax.Precision.HIGHEST)
    y = jnp.maximum(bn(y, g2, be2, m2, v2), 0.0)
    y = lax.conv_general_dilated(y, w2, (stride, stride), ((1, 1), (1, 1)),
                                 dimension_numbers=('NCHW', 'OIHW', 'NCHW'),
                                 precision=lax.Precision.HIGHEST)
    return y


def init_params(key, indepth, outdepth):
    ks = jax.random.split(key, 10)
    g1 = 1.0 + 0.1 * jax.random.normal(ks[0], (indepth,), jnp.float32)
    be1 = 0.1 * jax.random.normal(ks[1], (indepth,), jnp.float32)
    m1 = 0.1 * jax.random.normal(ks[2], (indepth,), jnp.float32)
    v1 = jax.random.uniform(ks[3], (indepth,), jnp.float32, 0.5, 1.5)
    w1 = jax.random.normal(ks[4], (3, 3, indepth, outdepth), jnp.float32) \
        * (2.0 / (indepth * 9)) ** 0.5
    g2 = 1.0 + 0.1 * jax.random.normal(ks[5], (outdepth,), jnp.float32)
    be2 = 0.1 * jax.random.normal(ks[6], (outdepth,), jnp.float32)
    m2 = 0.1 * jax.random.normal(ks[7], (outdepth,), jnp.float32)
    v2 = jax.random.uniform(ks[8], (outdepth,), jnp.float32, 0.5, 1.5)
    w2 = jax.random.normal(ks[9], (3, 3, outdepth, outdepth), jnp.float32) \
        * (2.0 / (outdepth * 9)) ** 0.5
    return (g1, be1, m1, v1, w1, g2, be2, m2, v2, w2)


if __name__ == "__main__":
    key = jax.random.PRNGKey(0)
    kx, kp = jax.random.split(key)

    N, Cin, H, W = 2, 4, 16, 16   # small NCHW input, indepth=4
    outdepth = 8                  # outdepth=8, stride=2

    x = jax.random.normal(kx, (N, Cin, H, W), jnp.float32)
    params = init_params(kp, Cin, outdepth)

    out = jax.block_until_ready(downsample_forward(x, params, stride=2))
    assert out.shape == (N, outdepth, H // 2, W // 2), out.shape

    ref = jax.block_until_ready(reference_forward(x, params, stride=2))
    max_err = float(jnp.max(jnp.abs(out - ref)))
    # bf16 matmul operands (f32 accumulation) -> slightly relaxed tolerance.
    assert jnp.allclose(out, ref, atol=3e-2, rtol=3e-2), max_err

    print("KERNEL_OK")
</pallas_src>

<mosaic_0001>
module attributes {stable_mosaic.version = 11 : i64} {
  func.func @_downsample_fused_kernel(%arg0: i32, %arg1: memref<1x16x8x8xbf16, #tpu.memory_space<vmem>>, %arg2: memref<1x8xf32, #tpu.memory_space<vmem>>, %arg3: memref<1x8xf32, #tpu.memory_space<vmem>>, %arg4: memref<48x16xbf16, #tpu.memory_space<vmem>>, %arg5: memref<1x16xf32, #tpu.memory_space<vmem>>, %arg6: memref<1x16xf32, #tpu.memory_space<vmem>>, %arg7: memref<96x8xbf16, #tpu.memory_space<vmem>>, %arg8: memref<1x8x8x8xf32, #tpu.memory_space<vmem>>, %arg9: memref<18x9x8xf32, #tpu.memory_space<vmem>>, %arg10: memref<18x9x16xf32, #tpu.memory_space<vmem>>) attributes {dimension_semantics = [#tpu.dimension_semantics<parallel>], iteration_bounds = array<i64: 2>, scalar_prefetch = 0 : i64, scratch_operands = 2 : i64, tpu.core_type = #tpu.core_type<tc>, window_params = [{transform_indices = @transform_0, window_bounds = array<i64: 1, 16, 8, 8>}, {pipeline_mode = #tpu.pipeline_mode<synchronous>, transform_indices = @transform_1, window_bounds = array<i64: 1, 8>}, {pipeline_mode = #tpu.pipeline_mode<synchronous>, transform_indices = @transform_2, window_bounds = array<i64: 1, 8>}, {pipeline_mode = #tpu.pipeline_mode<synchronous>, transform_indices = @transform_3, window_bounds = array<i64: 48, 16>}, {pipeline_mode = #tpu.pipeline_mode<synchronous>, transform_indices = @transform_4, window_bounds = array<i64: 1, 16>}, {pipeline_mode = #tpu.pipeline_mode<synchronous>, transform_indices = @transform_5, window_bounds = array<i64: 1, 16>}, {pipeline_mode = #tpu.pipeline_mode<synchronous>, transform_indices = @transform_6, window_bounds = array<i64: 96, 8>}, {transform_indices = @transform_7, window_bounds = array<i64: 1, 8, 8, 8>}]} {
    %c0 = arith.constant 0 : index
    %c0_0 = arith.constant 0 : index
    %c0_1 = arith.constant 0 : index
    %c0_2 = arith.constant 0 : index
    %0 = vector.load %arg1[%c0, %c0_0, %c0_1, %c0_2] : memref<1x16x8x8xbf16, #tpu.memory_space<vmem>>, vector<1x16x8x8xbf16>
    %1 = arith.extf %0 : vector<1x16x8x8xbf16> to vector<1x16x8x8xf32>
    %c0_3 = arith.constant 0 : index
    %c0_4 = arith.constant 0 : index
    %2 = vector.load %arg2[%c0_3, %c0_4] : memref<1x8xf32, #tpu.memory_space<vmem>>, vector<1x8xf32>
    %3 = vector.shape_cast %2 : vector<1x8xf32> to vector<1x1x1x8xf32>
    %4 = vector.broadcast %3 : vector<1x1x1x8xf32> to vector<1x16x8x8xf32>
    %5 = arith.mulf %1, %4 : vector<1x16x8x8xf32>
    %c0_5 = arith.constant 0 : index
    %c0_6 = arith.constant 0 : index
    %6 = vector.load %arg3[%c0_5, %c0_6] : memref<1x8xf32, #tpu.memory_space<vmem>>, vector<1x8xf32>
    %7 = vector.shape_cast %6 : vector<1x8xf32> to vector<1x1x1x8xf32>
    %8 = vector.broadcast %7 : vector<1x1x1x8xf32> to vector<1x16x8x8xf32>
    %9 = arith.addf %5, %8 : vector<1x16x8x8xf32>
    %cst = arith.constant 0.000000e+00 : f32
    %10 = vector.broadcast %cst : f32 to vector<1x16x8x8xf32>
    %11 = arith.maximumf %9, %10 : vector<1x16x8x8xf32>
    %12 = vector.shape_cast %11 : vector<1x16x8x8xf32> to vector<16x8x8xf32>
    %cst_7 = arith.constant 0.000000e+00 : f32
    %13 = vector.broadcast %cst_7 : f32 to vector<1x9x8xf32>
    %c0_8 = arith.constant 0 : index
    %c0_9 = arith.constant 0 : index
    %c0_10 = arith.constant 0 : index
    %14 = vector.load %arg9[%c0_8, %c0_9, %c0_10] : memref<18x9x8xf32, #tpu.memory_space<vmem>>, vector<1x9x8xf32>
    tpu.vector_store %arg9[%c0_8, %c0_9, %c0_10], %13 {strides = array<i32>} : memref<18x9x8xf32, #tpu.memory_space<vmem>>, vector<1x9x8xf32>,
    %cst_11 = arith.constant 0.000000e+00 : f32
    %15 = vector.broadcast %cst_11 : f32 to vector<1x9x8xf32>
    %c17 = arith.constant 17 : index
    %c0_12 = arith.constant 0 : index
    %c0_13 = arith.constant 0 : index
    %16 = vector.load %arg9[%c17, %c0_12, %c0_13] : memref<18x9x8xf32, #tpu.memory_space<vmem>>, vector<1x9x8xf32>
    tpu.vector_store %arg9[%c17, %c0_12, %c0_13], %15 {strides = array<i32>} : memref<18x9x8xf32, #tpu.memory_space<vmem>>, vector<1x9x8xf32>,
    %cst_14 = arith.constant 0.000000e+00 : f32
    %17 = vector.broadcast %cst_14 : f32 to vector<16x1x4xf32>
    %c1 = arith.constant 1 : index
    %c0_15 = arith.constant 0 : index
    %c0_16 = arith.constant 0 : index
    %18 = vector.load %arg9[%c1, %c0_15, %c0_16] : memref<18x9x8xf32, #tpu.memory_space<vmem>>, vector<16x1x4xf32>
    tpu.vector_store %arg9[%c1, %c0_15, %c0_16], %17 {strides = array<i32>} : memref<18x9x8xf32, #tpu.memory_space<vmem>>, vector<16x1x4xf32>,
    %cst_17 = arith.constant 0.000000e+00 : f32
    %19 = vector.broadcast %cst_17 : f32 to vector<16x1x4xf32>
    %c1_18 = arith.constant 1 : index
    %c8 = arith.constant 8 : index
    %c4 = arith.constant 4 : index
    %20 = vector.load %arg9[%c1_18, %c8, %c4] : memref<18x9x8xf32, #tpu.memory_space<vmem>>, vector<16x1x4xf32>
    tpu.vector_store %arg9[%c1_18, %c8, %c4], %19 {strides = array<i32>} : memref<18x9x8xf32, #tpu.memory_space<vmem>>, vector<16x1x4xf32>,
    %21 = vector.extract_strided_slice %12 {offsets = [0, 0, 0], sizes = [16, 8, 4], strides = [1, 1, 1]} : vector<16x8x8xf32> to vector<16x8x4xf32>
    %c1_19 = arith.constant 1 : index
    %c0_20 = arith.constant 0 : index
    %c4_21 = arith.constant 4 : index
    %22 = vector.load %arg9[%c1_19, %c0_20, %c4_21] : memref<18x9x8xf32, #tpu.memory_space<vmem>>, vector<16x8x4xf32>
    tpu.vector_store %arg9[%c1_19, %c0_20, %c4_21], %21 {strides = array<i32>} : memref<18x9x8xf32, #tpu.memory_space<vmem>>, vector<16x8x4xf32>,
    %23 = vector.extract_strided_slice %12 {offsets = [0, 0, 4], sizes = [16, 8, 4], strides = [1, 1, 1]} : vector<16x8x8xf32> to vector<16x8x4xf32>
    %c1_22 = arith.constant 1 : index
    %c1_23 = arith.constant 1 : index
    %c0_24 = arith.constant 0 : index
    %24 = vector.load %arg9[%c1_22, %c1_23, %c0_24] : memref<18x9x8xf32, #tpu.memory_space<vmem>>, vector<16x8x4xf32>
    tpu.vector_store %arg9[%c1_22, %c1_23, %c0_24], %23 {strides = array<i32>} : memref<18x9x8xf32, #tpu.memory_space<vmem>>, vector<16x8x4xf32>,
    %c0_25 = arith.constant 0 : index
    %c0_26 = arith.constant 0 : index
    %c0_27 = arith.constant 0 : index
    %25 = vector.load %arg9[%c0_25, %c0_26, %c0_27] : memref<18x9x8xf32, #tpu.memory_space<vmem>>, vector<16x8x8xf32>
    %c0_28 = arith.constant 0 : index
    %c1_29 = arith.constant 1 : index
    %c0_30 = arith.constant 0 : index
    %26 = vector.load %arg9[%c0_28, %c1_29, %c0_30] : memref<18x9x8xf32, #tpu.memory_space<vmem>>, vector<16x8x8xf32>
    %c1_31 = arith.constant 1 : index
    %c0_32 = arith.constant 0 : index
    %c0_33 = arith.constant 0 : index
    %27 = vector.load %arg9[%c1_31, %c0_32, %c0_33] : memref<18x9x8xf32, #tpu.memory_space<vmem>>, vector<16x8x8xf32>
    %c1_34 = arith.constant 1 : index
    %c1_35 = arith.constant 1 : index
    %c0_36 = arith.constant 0 : index
    %28 = vector.load %arg9[%c1_34, %c1_35, %c0_36] : memref<18x9x8xf32, #tpu.memory_space<vmem>>, vector<16x8x8xf32>
    %c2 = arith.constant 2 : index
    %c0_37 = arith.constant 0 : index
    %c0_38 = arith.constant 0 : index
    %29 = vector.load %arg9[%c2, %c0_37, %c0_38] : memref<18x9x8xf32, #tpu.memory_space<vmem>>, vector<16x8x8xf32>
    %c2_39 = arith.constant 2 : index
    %c1_40 = arith.constant 1 : index
    %c0_41 = arith.constant 0 : index
    %30 = vector.load %arg9[%c2_39, %c1_40, %c0_41] : memref<18x9x8xf32, #tpu.memory_space<vmem>>, vector<16x8x8xf32>
    %31 = tpu.concatenate %25, %26, %27, %28, %29, %30 in 2 : vector<16x8x8xf32>, vector<16x8x8xf32>, vector<16x8x8xf32>, vector<16x8x8xf32>, vector<16x8x8xf32>, vector<16x8x8xf32> -> vector<16x8x48xf32>
    %32 = vector.shape_cast %31 : vector<16x8x48xf32> to vector<128x48xf32>
    %33 = arith.truncf %32 : vector<128x48xf32> to vector<128x48xbf16>
    %c0_42 = arith.constant 0 : index
    %c0_43 = arith.constant 0 : index
    %34 = vector.load %arg4[%c0_42, %c0_43] : memref<48x16xbf16, #tpu.memory_space<vmem>>, vector<48x16xbf16>
    %cst_44 = arith.constant dense<0.000000e+00> : vector<128x16xf32>
    %35 = tpu.matmul %33, %34, %cst_44 {dimension_numbers = #tpu.dot_dimension_numbers<[1], [0], [0], [1], [0, 0, 1, 1], [], []>} : vector<128x48xbf16>, vector<48x16xbf16>, vector<128x16xf32> -> vector<128x16xf32>
    %c0_45 = arith.constant 0 : index
    %c0_46 = arith.constant 0 : index
    %36 = vector.load %arg5[%c0_45, %c0_46] : memref<1x16xf32, #tpu.memory_space<vmem>>, vector<1x16xf32>
    %37 = vector.broadcast %36 : vector<1x16xf32> to vector<128x16xf32>
    %38 = arith.mulf %35, %37 : vector<128x16xf32>
    %c0_47 = arith.constant 0 : index
    %c0_48 = arith.constant 0 : index
    %39 = vector.load %arg6[%c0_47, %c0_48] : memref<1x16xf32, #tpu.memory_space<vmem>>, vector<1x16xf32>
    %40 = vector.broadcast %39 : vector<1x16xf32> to vector<128x16xf32>
    %41 = arith.addf %38, %40 : vector<128x16xf32>
    %cst_49 = arith.constant 0.000000e+00 : f32
    %42 = vector.broadcast %cst_49 : f32 to vector<128x16xf32>
    %43 = arith.maximumf %41, %42 : vector<128x16xf32>
    %44 = vector.shape_cast %43 : vector<128x16xf32> to vector<16x8x16xf32>
    %cst_50 = arith.constant 0.000000e+00 : f32
    %45 = vector.broadcast %cst_50 : f32 to vector<1x9x16xf32>
    %c0_51 = arith.constant 0 : index
    %c0_52 = arith.constant 0 : index
    %c0_53 = arith.constant 0 : index
    %46 = vector.load %arg10[%c0_51, %c0_52, %c0_53] : memref<18x9x16xf32, #tpu.memory_space<vmem>>, vector<1x9x16xf32>
    tpu.vector_store %arg10[%c0_51, %c0_52, %c0_53], %45 {strides = array<i32>} : memref<18x9x16xf32, #tpu.memory_space<vmem>>, vector<1x9x16xf32>,
    %cst_54 = arith.constant 0.000000e+00 : f32
    %47 = vector.broadcast %cst_54 : f32 to vector<1x9x16xf32>
    %c17_55 = arith.constant 17 : index
    %c0_56 = arith.constant 0 : index
    %c0_57 = arith.constant 0 : index
    %48 = vector.load %arg10[%c17_55, %c0_56, %c0_57] : memref<18x9x16xf32, #tpu.memory_space<vmem>>, vector<1x9x16xf32>
    tpu.vector_store %arg10[%c17_55, %c0_56, %c0_57], %47 {strides = array<i32>} : memref<18x9x16xf32, #tpu.memory_space<vmem>>, vector<1x9x16xf32>,
    %cst_58 = arith.constant 0.000000e+00 : f32
    %49 = vector.broadcast %cst_58 : f32 to vector<16x1x8xf32>
    %c1_59 = arith.constant 1 : index
    %c0_60 = arith.constant 0 : index
    %c0_61 = arith.constant 0 : index
    %50 = vector.load %arg10[%c1_59, %c0_60, %c0_61] : memref<18x9x16xf32, #tpu.memory_space<vmem>>, vector<16x1x8xf32>
    tpu.vector_store %arg10[%c1_59, %c0_60, %c0_61], %49 {strides = array<i32>} : memref<18x9x16xf32, #tpu.memory_space<vmem>>, vector<16x1x8xf32>,
    %cst_62 = arith.constant 0.000000e+00 : f32
    %51 = vector.broadcast %cst_62 : f32 to vector<16x1x8xf32>
    %c1_63 = arith.constant 1 : index
    %c8_64 = arith.constant 8 : index
    %c8_65 = arith.constant 8 : index
    %52 = vector.load %arg10[%c1_63, %c8_64, %c8_65] : memref<18x9x16xf32, #tpu.memory_space<vmem>>, vector<16x1x8xf32>
    tpu.vector_store %arg10[%c1_63, %c8_64, %c8_65], %51 {strides = array<i32>} : memref<18x9x16xf32, #tpu.memory_space<vmem>>, vector<16x1x8xf32>,
    %53 = vector.extract_strided_slice %44 {offsets = [0, 0, 0], sizes = [16, 8, 8], strides = [1, 1, 1]} : vector<16x8x16xf32> to vector<16x8x8xf32>
    %c1_66 = arith.constant 1 : index
    %c0_67 = arith.constant 0 : index
    %c8_68 = arith.constant 8 : index
    %54 = vector.load %arg10[%c1_66, %c0_67, %c8_68] : memref<18x9x16xf32, #tpu.memory_space<vmem>>, vector<16x8x8xf32>
    tpu.vector_store %arg10[%c1_66, %c0_67, %c8_68], %53 {strides = array<i32>} : memref<18x9x16xf32, #tpu.memory_space<vmem>>, vector<16x8x8xf32>,
    %55 = vector.extract_strided_slice %44 {offsets = [0, 0, 8], sizes = [16, 8, 8], strides = [1, 1, 1]} : vector<16x8x16xf32> to vector<16x8x8xf32>
    %c1_69 = arith.constant 1 : index
    %c1_70 = arith.constant 1 : index
    %c0_71 = arith.constant 0 : index
    %56 = vector.load %arg10[%c1_69, %c1_70, %c0_71] : memref<18x9x16xf32, #tpu.memory_space<vmem>>, vector<16x8x8xf32>
    tpu.vector_store %arg10[%c1_69, %c1_70, %c0_71], %55 {strides = array<i32>} : memref<18x9x16xf32, #tpu.memory_space<vmem>>, vector<16x8x8xf32>,
    %c0_72 = arith.constant 0 : index
    %c0_73 = arith.constant 0 : index
    %c0_74 = arith.constant 0 : index
    %57 = vector.load %arg10[%c0_72, %c0_73, %c0_74] : memref<18x9x16xf32, #tpu.memory_space<vmem>>, vector<18x9x16xf32>
    %58 = vector.shape_cast %57 : vector<18x9x16xf32> to vector<9x2x9x16xf32>
    %59 = vector.extract_strided_slice %58 {offsets = [0, 0, 0, 0], sizes = [8, 1, 9, 16], strides = [1, 1, 1, 1]} : vector<9x2x9x16xf32> to vector<8x1x9x16xf32>
    %60 = vector.shape_cast %59 : vector<8x1x9x16xf32> to vector<8x9x16xf32>
    %61 = vector.extract_strided_slice %60 {offsets = [0, 0, 0], sizes = [8, 8, 16], strides = [1, 1, 1]} : vector<8x9x16xf32> to vector<8x8x16xf32>
    %62 = vector.extract_strided_slice %60 {offsets = [0, 1, 0], sizes = [8, 8, 16], strides = [1, 1, 1]} : vector<8x9x16xf32> to vector<8x8x16xf32>
    %63 = vector.extract_strided_slice %58 {offsets = [0, 1, 0, 0], sizes = [8, 1, 9, 16], strides = [1, 1, 1, 1]} : vector<9x2x9x16xf32> to vector<8x1x9x16xf32>
    %64 = vector.shape_cast %63 : vector<8x1x9x16xf32> to vector<8x9x16xf32>
    %65 = vector.extract_strided_slice %64 {offsets = [0, 0, 0], sizes = [8, 8, 16], strides = [1, 1, 1]} : vector<8x9x16xf32> to vector<8x8x16xf32>
    %66 = vector.extract_strided_slice %64 {offsets = [0, 1, 0], sizes = [8, 8, 16], strides = [1, 1, 1]} : vector<8x9x16xf32> to vector<8x8x16xf32>
    %67 = vector.extract_strided_slice %58 {offsets = [1, 0, 0, 0], sizes = [8, 1, 9, 16], strides = [1, 1, 1, 1]} : vector<9x2x9x16xf32> to vector<8x1x9x16xf32>
    %68 = vector.shape_cast %67 : vector<8x1x9x16xf32> to vector<8x9x16xf32>
    %69 = vector.extract_strided_slice %68 {offsets = [0, 0, 0], sizes = [8, 8, 16], strides = [1, 1, 1]} : vector<8x9x16xf32> to vector<8x8x16xf32>
    %70 = vector.extract_strided_slice %68 {offsets = [0, 1, 0], sizes = [8, 8, 16], strides = [1, 1, 1]} : vector<8x9x16xf32> to vector<8x8x16xf32>
    %71 = tpu.concatenate %61, %62, %65, %66, %69, %70 in 2 : vector<8x8x16xf32>, vector<8x8x16xf32>, vector<8x8x16xf32>, vector<8x8x16xf32>, vector<8x8x16xf32>, vector<8x8x16xf32> -> vector<8x8x96xf32>
    %72 = vector.shape_cast %71 : vector<8x8x96xf32> to vector<64x96xf32>
    %73 = arith.truncf %72 : vector<64x96xf32> to vector<64x96xbf16>
    %c0_75 = arith.constant 0 : index
    %c0_76 = arith.constant 0 : index
    %74 = vector.load %arg7[%c0_75, %c0_76] : memref<96x8xbf16, #tpu.memory_space<vmem>>, vector<96x8xbf16>
    %cst_77 = arith.constant dense<0.000000e+00> : vector<64x8xf32>
    %75 = tpu.matmul %73, %74, %cst_77 {dimension_numbers = #tpu.dot_dimension_numbers<[1], [0], [0], [1], [0, 0, 1, 1], [], []>} : vector<64x96xbf16>, vector<96x8xbf16>, vector<64x8xf32> -> vector<64x8xf32>
    %76 = vector.shape_cast %75 : vector<64x8xf32> to vector<1x8x8x8xf32>
    %c0_78 = arith.constant 0 : index
    %c0_79 = arith.constant 0 : index
    %c0_80 = arith.constant 0 : index
    %c0_81 = arith.constant 0 : index
    %77 = vector.load %arg8[%c0_78, %c0_79, %c0_80, %c0_81] : memref<1x8x8x8xf32, #tpu.memory_space<vmem>>, vector<1x8x8x8xf32>
    tpu.vector_store %arg8[%c0_78, %c0_79, %c0_80, %c0_81], %76 {strides = array<i32>} : memref<1x8x8x8xf32, #tpu.memory_space<vmem>>, vector<1x8x8x8xf32>,
    return
  }
  func.func @transform_0(%arg0: i32) -> (i32, i32, i32, i32) {
    %c0_i32 = arith.constant 0 : i32
    %c0_i32_0 = arith.constant 0 : i32
    %c0_i32_1 = arith.constant 0 : i32
    %c0_i32_2 = arith.constant 0 : i32
    return %arg0, %c0_i32, %c0_i32_0, %c0_i32_1 : i32, i32, i32, i32
  }
  func.func @transform_1(%arg0: i32) -> (i32, i32) {
    %c0_i32 = arith.constant 0 : i32
    %c0_i32_0 = arith.constant 0 : i32
    %c0_i32_1 = arith.constant 0 : i32
    return %c0_i32, %c0_i32_0 : i32, i32
  }
  func.func @transform_2(%arg0: i32) -> (i32, i32) {
    %c0_i32 = arith.constant 0 : i32
    %c0_i32_0 = arith.constant 0 : i32
    %c0_i32_1 = arith.constant 0 : i32
    return %c0_i32, %c0_i32_0 : i32, i32
  }
  func.func @transform_3(%arg0: i32) -> (i32, i32) {
    %c0_i32 = arith.constant 0 : i32
    %c0_i32_0 = arith.constant 0 : i32
    %c0_i32_1 = arith.constant 0 : i32
    return %c0_i32, %c0_i32_0 : i32, i32
  }
  func.func @transform_4(%arg0: i32) -> (i32, i32) {
    %c0_i32 = arith.constant 0 : i32
    %c0_i32_0 = arith.constant 0 : i32
    %c0_i32_1 = arith.constant 0 : i32
    return %c0_i32, %c0_i32_0 : i32, i32
  }
  func.func @transform_5(%arg0: i32) -> (i32, i32) {
    %c0_i32 = arith.constant 0 : i32
    %c0_i32_0 = arith.constant 0 : i32
    %c0_i32_1 = arith.constant 0 : i32
    return %c0_i32, %c0_i32_0 : i32, i32
  }
  func.func @transform_6(%arg0: i32) -> (i32, i32) {
    %c0_i32 = arith.constant 0 : i32
    %c0_i32_0 = arith.constant 0 : i32
    %c0_i32_1 = arith.constant 0 : i32
    return %c0_i32, %c0_i32_0 : i32, i32
  }
  func.func @transform_7(%arg0: i32) -> (i32, i32, i32, i32) {
    %c0_i32 = arith.constant 0 : i32
    %c0_i32_0 = arith.constant 0 : i32
    %c0_i32_1 = arith.constant 0 : i32
    %c0_i32_2 = arith.constant 0 : i32
    return %arg0, %c0_i32, %c0_i32_0, %c0_i32_1 : i32, i32, i32, i32
  }
}

</mosaic_0001>

<llo_original>
// kernel: tpu_custom_call.1
$region0: #{tpu_custom_call.1}
  #allocation0 [shape = 'u32[]', space=smem, size = 0x4, offset = 0x4, fixed_abs, tag = 'smem constant byte address 0x4 - core index']
  #allocation1 [shape = 'u32[144,128]{1,0:T(1,128)}', space=vmem, size = 0x12000, scoped, tag = 'internal scratch']
  #allocation2 [shape = 'f32[18,9,8]{2,1,0:T(8,128)}', space=vmem, size = 0x24000, scoped, tag = 'scratch operand']
  #allocation3 [shape = 'f32[18,9,16]{2,1,0:T(8,128)}', space=vmem, size = 0x24000, scoped, tag = 'scratch operand']
  %s0 = inlined_call_operand.vmem [shape: bf16[2,16,8,8], index: 0, kind: input, shape index: {}]
  %s1 = inlined_call_operand.vmem [shape: f32[1,8], index: 1, kind: input, shape index: {}]
  %s2 = inlined_call_operand.vmem [shape: f32[1,8], index: 2, kind: input, shape index: {}]
  %s3 = inlined_call_operand.vmem [shape: bf16[48,16], index: 3, kind: input, shape index: {}]
  %s4 = inlined_call_operand.vmem [shape: f32[1,16], index: 4, kind: input, shape index: {}]
  %s5 = inlined_call_operand.vmem [shape: f32[1,16], index: 5, kind: input, shape index: {}]
  %s6 = inlined_call_operand.vmem [shape: bf16[96,8], index: 6, kind: input, shape index: {}]
  %s7 = inlined_call_operand.hbm [shape: f32[2,8,8,8], index: 7, kind: output, shape index: {}]
  %s8 = sld [smem:[#allocation0]]
  $region61: #{tpu_custom_call.1} parent=0
    _
  %s10 = ssub.s32 1, %s8
  %s11 = scalar_select 0, %s10, %s8
  $region1: #{tpu_custom_call.1} parent=0
    #allocation4 [shape = 'u8[65536]{0}', space=vmem, size = 0x10000, scoped, tag = 'output window, operand 0']
    #allocation5 [shape = 's32[2]{0}', space=sflag, size = 0x8, scoped, tag = 'scoped memory for tpu_custom_call.1']
    %12 = vsyncpa [#allocation5], 0
    %s13 = scalar_lea.sflag [#allocation5], 1
    %14 = vsyncpa %s13, 0
    loop: start=0, step=1, limit=4
    $region2: #{tpu_custom_call.1} parent=1 // loop_pre_header
      _
    $region3: #{tpu_custom_call.1} parent=1 // loop_header
      %s16 = sphi 0, %s20
      %p17 = scmp.ge.s32.totalorder %s16, 4
      %s26 = sphi 0, %s28
      %s29 = sphi 0, %s26
      %s30 = sphi 0, %s29
      %s46 = sphi 0, %s30
      %s50 = sphi 0, %s50
      %s52 = sphi 0, %s50
      %s53 = sphi 0, %s52
      %s67 = sphi 0, %s53
      %s71 = sphi 0, %s71
      %s73 = sphi 0, %s71
      %s74 = sphi 0, %s73
      %s88 = sphi 0, %s74
      %s92 = sphi 0, %s92
      %s94 = sphi 0, %s92
      %s95 = sphi 0, %s94
      %s109 = sphi 0, %s95
      %s113 = sphi 0, %s113
      %s115 = sphi 0, %s113
      %s116 = sphi 0, %s115
      %s130 = sphi 0, %s116
      %s134 = sphi 0, %s134
      %s136 = sphi 0, %s134
      %s137 = sphi 0, %s136
      %s151 = sphi 0, %s137
      %s155 = sphi 0, %s155
      %s157 = sphi 0, %s155
      %s158 = sphi 0, %s157
      %s172 = sphi 0, %s158
      %s178 = sphi 0, %s180
      %s181 = sphi 0, %s178
      %s182 = sphi 0, %s181
      %s198 = sphi 0, %s182
    $region4: #{tpu_custom_call.1} parent=1 // loop_header_branch
      %19 = sbr.rel (%p17) target = $region8
    $region5: #{tpu_custom_call.1} parent=1 // loop_body
      %s21 = ssub.s32 %s16, 1
      %s22 = ssub.s32 %s16, 2
      %s23 = sadd.s32 %s16, 1
      %s24 = ssub.s32 %s16, %s23
      %p25 = scmp.eq.s32.totalorder %s24, 0
      %s27 = sadd.s32 %s26, 1
      %s28 = scalar_select %p25, %s26, %s27
      %p31 = pneg %p25
      %p32 = scmp.eq.s32.totalorder %s16, 1
      %p33 = por %p31, %p32
      %p34 = scmp.ne.s32.totalorder %s26, %s29
      %p35 = scmp.eq.s32.totalorder %s16, 0
      %p36 = por %p34, %p35
      %p37 = scmp.ne.s32.totalorder %s26, %s29
      %p38 = scmp.eq.s32.totalorder %s21, 1
      %p39 = por %p37, %p38
      %p40 = scmp.ne.s32.totalorder %s29, %s30
      %p41 = scmp.eq.s32.totalorder %s21, 0
      %p42 = por %p40, %p41
      %p43 = scmp.ne.s32.totalorder %s29, %s30
      %p44 = scmp.eq.s32.totalorder %s22, 1
      %p45 = por %p43, %p44
      %p47 = scmp.ne.s32.totalorder %s30, %s46
      %p48 = scmp.eq.s32.totalorder %s22, 0
      %p49 = por %p47, %p48
      %s51 = sadd.s32 %s50, 1
      %p54 = scmp.eq.s32.totalorder %s16, 1
      %p55 = scmp.ne.s32.totalorder %s50, %s52
      %p56 = scmp.eq.s32.totalorder %s16, 0
      %p57 = por %p55, %p56
      %p58 = scmp.ne.s32.totalorder %s50, %s52
      %p59 = scmp.eq.s32.totalorder %s21, 1
      %p60 = por %p58, %p59
      %p61 = scmp.ne.s32.totalorder %s52, %s53
      %p62 = scmp.eq.s32.totalorder %s21, 0
      %p63 = por %p61, %p62
      %p64 = scmp.ne.s32.totalorder %s52, %s53
      %p65 = scmp.eq.s32.totalorder %s22, 1
      %p66 = por %p64, %p65
      %p68 = scmp.ne.s32.totalorder %s53, %s67
      %p69 = scmp.eq.s32.totalorder %s22, 0
      %p70 = por %p68, %p69
      %s72 = sadd.s32 %s71, 1
      %p75 = scmp.eq.s32.totalorder %s16, 1
      %p76 = scmp.ne.s32.totalorder %s71, %s73
      %p77 = scmp.eq.s32.totalorder %s16, 0
      %p78 = por %p76, %p77
      %p79 = scmp.ne.s32.totalorder %s71, %s73
      %p80 = scmp.eq.s32.totalorder %s21, 1
      %p81 = por %p79, %p80
      %p82 = scmp.ne.s32.totalorder %s73, %s74
      %p83 = scmp.eq.s32.totalorder %s21, 0
      %p84 = por %p82, %p83
      %p85 = scmp.ne.s32.totalorder %s73, %s74
      %p86 = scmp.eq.s32.totalorder %s22, 1
      %p87 = por %p85, %p86
      %p89 = scmp.ne.s32.totalorder %s74, %s88
      %p90 = scmp.eq.s32.totalorder %s22, 0
      %p91 = por %p89, %p90
      %s93 = sadd.s32 %s92, 1
      %p96 = scmp.eq.s32.totalorder %s16, 1
      %p97 = scmp.ne.s32.totalorder %s92, %s94
      %p98 = scmp.eq.s32.totalorder %s16, 0
      %p99 = por %p97, %p98
      %p100 = scmp.ne.s32.totalorder %s92, %s94
      %p101 = scmp.eq.s32.totalorder %s21, 1
      %p102 = por %p100, %p101
      %p103 = scmp.ne.s32.totalorder %s94, %s95
      %p104 = scmp.eq.s32.totalorder %s21, 0
      %p105 = por %p103, %p104
      %p106 = scmp.ne.s32.totalorder %s94, %s95
      %p107 = scmp.eq.s32.totalorder %s22, 1
      %p108 = por %p106, %p107
      %p110 = scmp.ne.s32.totalorder %s95, %s109
      %p111 = scmp.eq.s32.totalorder %s22, 0
      %p112 = por %p110, %p111
      %s114 = sadd.s32 %s113, 1
      %p117 = scmp.eq.s32.totalorder %s16, 1
      %p118 = scmp.ne.s32.totalorder %s113, %s115
      %p119 = scmp.eq.s32.totalorder %s16, 0
      %p120 = por %p118, %p119
      %p121 = scmp.ne.s32.totalorder %s113, %s115
      %p122 = scmp.eq.s32.totalorder %s21, 1
      %p123 = por %p121, %p122
      %p124 = scmp.ne.s32.totalorder %s115, %s116
      %p125 = scmp.eq.s32.totalorder %s21, 0
      %p126 = por %p124, %p125
      %p127 = scmp.ne.s32.totalorder %s115, %s116
      %p128 = scmp.eq.s32.totalorder %s22, 1
      %p129 = por %p127, %p128
      %p131 = scmp.ne.s32.totalorder %s116, %s130
      %p132 = scmp.eq.s32.totalorder %s22, 0
      %p133 = por %p131, %p132
      %s135 = sadd.s32 %s134, 1
      %p138 = scmp.eq.s32.totalorder %s16, 1
      %p139 = scmp.ne.s32.totalorder %s134, %s136
      %p140 = scmp.eq.s32.totalorder %s16, 0
      %p141 = por %p139, %p140
      %p142 = scmp.ne.s32.totalorder %s134, %s136
      %p143 = scmp.eq.s32.totalorder %s21, 1
      %p144 = por %p142, %p143
      %p145 = scmp.ne.s32.totalorder %s136, %s137
      %p146 = scmp.eq.s32.totalorder %s21, 0
      %p147 = por %p145, %p146
      %p148 = scmp.ne.s32.totalorder %s136, %s137
      %p149 = scmp.eq.s32.totalorder %s22, 1
      %p150 = por %p148, %p149
      %p152 = scmp.ne.s32.totalorder %s137, %s151
      %p153 = scmp.eq.s32.totalorder %s22, 0
      %p154 = por %p152, %p153
      %s156 = sadd.s32 %s155, 1
      %p159 = scmp.eq.s32.totalorder %s16, 1
      %p160 = scmp.ne.s32.totalorder %s155, %s157
      %p161 = scmp.eq.s32.totalorder %s16, 0
      %p162 = por %p160, %p161
      %p163 = scmp.ne.s32.totalorder %s155, %s157
      %p164 = scmp.eq.s32.totalorder %s21, 1
      %p165 = por %p163, %p164
      %p166 = scmp.ne.s32.totalorder %s157, %s158
      %p167 = scmp.eq.s32.totalorder %s21, 0
      %p168 = por %p166, %p167
      %p169 = scmp.ne.s32.totalorder %s157, %s158
      %p170 = scmp.eq.s32.totalorder %s22, 1
      %p171 = por %p169, %p170
      %p173 = scmp.ne.s32.totalorder %s158, %s172
      %p174 = scmp.eq.s32.totalorder %s22, 0
      %p175 = por %p173, %p174
      %s176 = ssub.s32 %s16, %s23
      %p177 = scmp.eq.s32.totalorder %s176, 0
      %s179 = sadd.s32 %s178, 1
      %s180 = scalar_select %p177, %s178, %s179
      %p183 = pneg %p177
      %p184 = scmp.eq.s32.totalorder %s16, 1
      %p185 = por %p183, %p184
      %p186 = scmp.ne.s32.totalorder %s178, %s181
      %p187 = scmp.eq.s32.totalorder %s16, 0
      %p188 = por %p186, %p187
      %p189 = scmp.ne.s32.totalorder %s178, %s181
      %p190 = scmp.eq.s32.totalorder %s21, 1
      %p191 = por %p189, %p190
      %p192 = scmp.ne.s32.totalorder %s181, %s182
      %p193 = scmp.eq.s32.totalorder %s21, 0
      %p194 = por %p192, %p193
      %p195 = scmp.ne.s32.totalorder %s181, %s182
      %p196 = scmp.eq.s32.totalorder %s22, 1
      %p197 = por %p195, %p196
      %p199 = scmp.ne.s32.totalorder %s182, %s198
      %p200 = scmp.eq.s32.totalorder %s22, 0
      %p201 = por %p199, %p200
      %p202 = scmp.le.s32.totalorder 1, %s16
      %p203 = scmp.lt.s32.totalorder %s16, 3
      %p204 = pnand %p202, %p203
      %p205 = pneg %p204
      // Predicated region
      $region9: #{tpu_custom_call.1} parent=5 // pred_check
        _
      $region10: #{tpu_custom_call.1} parent=5 // pred_check_branch
        %207 = sbr.rel (%p204) target = $region12
      $region11: #{tpu_custom_call.1} parent=5 // pred_region
        %s208 = ssub.s32 %s16, 1
        // Predicated region
        $region13: #{tpu_custom_call.1} parent=11 // pred_check
          %p209 = pneg %p63
        $region14: #{tpu_custom_call.1} parent=11 // pred_check_branch
          %211 = sbr.rel (%p209) target = $region16
        $region15: #{tpu_custom_call.1} parent=11 // pred_region
          _
        $region16: #{tpu_custom_call.1} parent=11 // pred_fallthru
          _
        // Predicated region
        $region17: #{tpu_custom_call.1} parent=11 // pred_check
          %p212 = pneg %p84
        $region18: #{tpu_custom_call.1} parent=11 // pred_check_branch
          %214 = sbr.rel (%p212) target = $region20
        $region19: #{tpu_custom_call.1} parent=11 // pred_region
          _
        $region20: #{tpu_custom_call.1} parent=11 // pred_fallthru
          _
        // Predicated region
        $region21: #{tpu_custom_call.1} parent=11 // pred_check
          %p215 = pneg %p105
        $region22: #{tpu_custom_call.1} parent=11 // pred_check_branch
          %217 = sbr.rel (%p215) target = $region24
        $region23: #{tpu_custom_call.1} parent=11 // pred_region
          _
        $region24: #{tpu_custom_call.1} parent=11 // pred_fallthru
          _
        // Predicated region
        $region25: #{tpu_custom_call.1} parent=11 // pred_check
          %p218 = pneg %p126
        $region26: #{tpu_custom_call.1} parent=11 // pred_check_branch
          %220 = sbr.rel (%p218) target = $region28
        $region27: #{tpu_custom_call.1} parent=11 // pred_region
          _
        $region28: #{tpu_custom_call.1} parent=11 // pred_fallthru
          _
        // Predicated region
        $region29: #{tpu_custom_call.1} parent=11 // pred_check
          %p221 = pneg %p147
        $region30: #{tpu_custom_call.1} parent=11 // pred_check_branch
          %223 = sbr.rel (%p221) target = $region32
        $region31: #{tpu_custom_call.1} parent=11 // pred_region
          _
        $region32: #{tpu_custom_call.1} parent=11 // pred_fallthru
          _
        // Predicated region
        $region33: #{tpu_custom_call.1} parent=11 // pred_check
          %p224 = pneg %p168
        $region34: #{tpu_custom_call.1} parent=11 // pred_check_branch
          %226 = sbr.rel (%p224) target = $region36
        $region35: #{tpu_custom_call.1} parent=11 // pred_region
          _
        $region36: #{tpu_custom_call.1} parent=11 // pred_fallthru
          _
      $region12: #{tpu_custom_call.1} parent=5 // pred_fallthru
        _
      %p227 = scmp.lt.s32.totalorder %s16, 2
      // Predicated region
      $region37: #{tpu_custom_call.1} parent=5 // pred_check
        %p228 = pneg %p227
      $region38: #{tpu_custom_call.1} parent=5 // pred_check_branch
        %230 = sbr.rel (%p228) target = $region40
      $region39: #{tpu_custom_call.1} parent=5 // pred_region
        // Predicated region
        $region41: #{tpu_custom_call.1} parent=39 // pred_check
          %p231 = pneg %p36
        $region42: #{tpu_custom_call.1} parent=39 // pred_check_branch
          %233 = sbr.rel (%p231) target = $region44
        $region43: #{tpu_custom_call.1} parent=39 // pred_region
          %p234 = scmp.lt.s32.totalorder %s16, 1
          %s235 = scalar_select %p234, %s16, 1
          %s236 = smul.addr %s235, 16
          %s237 = smul.addr %s236, 4
          %s238 = scalar_lea.vmem %s0, %s237
        $region44: #{tpu_custom_call.1} parent=39 // pred_fallthru
          _
      $region40: #{tpu_custom_call.1} parent=5 // pred_fallthru
        _
      %p239 = scmp.le.s32.totalorder 1, %s16
      %p240 = scmp.lt.s32.totalorder %s16, 3
      %p241 = pnand %p239, %p240
      %p242 = pneg %p241
      // Predicated region
      $region45: #{tpu_custom_call.1} parent=5 // pred_check
        _
      $region46: #{tpu_custom_call.1} parent=5 // pred_check_branch
        %244 = sbr.rel (%p241) target = $region48
      $region47: #{tpu_custom_call.1} parent=5 // pred_region
        %s245 = ssub.s32 %s16, 1
        %p246 = scmp.lt.s32.totalorder %s21, 1
        %s247 = scalar_select %p246, %s21, 1
        %s248 = smul.addr %s247, 16
        %s249 = smul.addr %s248, 4
        %s250 = scalar_lea.vmem %s0, %s249
        %p251 = pneg %p42
        %p252 = pneg %p39
        %p253 = pneg %p63
        %p254 = pneg %p60
        %p255 = pneg %p84
        %p256 = pneg %p81
        %p257 = pneg %p105
        %p258 = pneg %p102
        %p259 = pneg %p126
        %p260 = pneg %p123
        %p261 = pneg %p147
        %p262 = pneg %p144
        %p263 = pneg %p168
        %p264 = pneg %p165
        %p265 = pneg %p194
        %p266 = pneg %p191
        %s267 = sand.u32 %s181, 1
        %s268 = scalar_lea.sflag [#allocation5], %s267
        %s269 = sand.u32 %s181, 1
        %s270 = smul.addr %s269, 64
        %s271 = scalar_lea.vmem [#allocation4], %s270
        %p272 = scmp.lt.s32.totalorder %s21, 1
        %s273 = scalar_select %p272, %s21, 1
        %s274 = smul.addr %s273, 16
        %s275 = smul.addr %s274, 4
        %s276 = scalar_lea.vmem %s0, %s275
        %v278 = vld [vmem:[%s276] sm:$0xf]
        %v279 = vld [vmem:[%s276 + $0x4] sm:$0xf]
        %v280 = vld [vmem:[%s276 + $0x8] sm:$0xf]
        %v281 = vld [vmem:[%s276 + $0xc] sm:$0xf]
        %v282 = vld [vmem:[%s276 + $0x10] sm:$0xf]
        %v283 = vld [vmem:[%s276 + $0x14] sm:$0xf]
        %v284 = vld [vmem:[%s276 + $0x18] sm:$0xf]
        %v285 = vld [vmem:[%s276 + $0x1c] sm:$0xf]
        %v286 = vld [vmem:[%s276 + $0x20] sm:$0xf]
        %v287 = vld [vmem:[%s276 + $0x24] sm:$0xf]
        %v288 = vld [vmem:[%s276 + $0x28] sm:$0xf]
        %v289 = vld [vmem:[%s276 + $0x2c] sm:$0xf]
        %v290 = vld [vmem:[%s276 + $0x30] sm:$0xf]
        %v291 = vld [vmem:[%s276 + $0x34] sm:$0xf]
        %v292 = vld [vmem:[%s276 + $0x38] sm:$0xf]
        %v293 = vld [vmem:[%s276 + $0x3c] sm:$0xf]
        %v294 = vunpack.c.l.bf16 %v278
        %v295 = vunpack.c.l.bf16 %v279
        %v296 = vunpack.c.l.bf16 %v280
        %v297 = vunpack.c.l.bf16 %v281
        %v298 = vunpack.c.l.bf16 %v282
        %v299 = vunpack.c.l.bf16 %v283
        %v300 = vunpack.c.l.bf16 %v284
        %v301 = vunpack.c.l.bf16 %v285
        %v302 = vunpack.c.l.bf16 %v286
        %v303 = vunpack.c.l.bf16 %v287
        %v304 = vunpack.c.l.bf16 %v288
        %v305 = vunpack.c.l.bf16 %v289
        %v306 = vunpack.c.l.bf16 %v290
        %v307 = vunpack.c.l.bf16 %v291
        %v308 = vunpack.c.l.bf16 %v292
        %v309 = vunpack.c.l.bf16 %v293
        %v310 = vld [vmem:[%s1] sm:$0x1]
        %v312 = vlaneseq
        %v313 = vshrl.u32 %v312, 7
        %v314 = vsub.s32 0, %v313
        %v315 = vrot.slane %v310, %v314
        %v317 = vmul.f32 %v294, %v315
        %v318 = vmul.f32 %v295, %v315
        %v319 = vmul.f32 %v296, %v315
        %v320 = vmul.f32 %v297, %v315
        %v321 = vmul.f32 %v298, %v315
        %v322 = vmul.f32 %v299, %v315
        %v323 = vmul.f32 %v300, %v315
        %v324 = vmul.f32 %v301, %v315
        %v325 = vmul.f32 %v302, %v315
        %v326 = vmul.f32 %v303, %v315
        %v327 = vmul.f32 %v304, %v315
        %v328 = vmul.f32 %v305, %v315
        %v329 = vmul.f32 %v306, %v315
        %v330 = vmul.f32 %v307, %v315
        %v331 = vmul.f32 %v308, %v315
        %v332 = vmul.f32 %v309, %v315
        %v333 = vld [vmem:[%s2] sm:$0x1]
        %v335 = vlaneseq
        %v336 = vshrl.u32 %v335, 7
        %v337 = vsub.s32 0, %v336
        %v338 = vrot.slane %v333, %v337
        %v340 = vadd.f32 %v317, %v338
        %v341 = vadd.f32 %v318, %v338
        %v342 = vadd.f32 %v319, %v338
        %v343 = vadd.f32 %v320, %v338
        %v344 = vadd.f32 %v321, %v338
        %v345 = vadd.f32 %v322, %v338
        %v346 = vadd.f32 %v323, %v338
        %v347 = vadd.f32 %v324, %v338
        %v348 = vadd.f32 %v325, %v338
        %v349 = vadd.f32 %v326, %v338
        %v350 = vadd.f32 %v327, %v338
        %v351 = vadd.f32 %v328, %v338
        %v352 = vadd.f32 %v329, %v338
        %v353 = vadd.f32 %v330, %v338
        %v354 = vadd.f32 %v331, %v338
        %v355 = vadd.f32 %v332, %v338
        %v356 = vmax.f32 %v340, 0.0
        %v357 = vmax.f32 %v341, 0.0
        %v358 = vmax.f32 %v342, 0.0
        %v359 = vmax.f32 %v343, 0.0
        %v360 = vmax.f32 %v344, 0.0
        %v361 = vmax.f32 %v345, 0.0
        %v362 = vmax.f32 %v346, 0.0
        %v363 = vmax.f32 %v347, 0.0
        %v364 = vmax.f32 %v348, 0.0
        %v365 = vmax.f32 %v349, 0.0
        %v366 = vmax.f32 %v350, 0.0
        %v367 = vmax.f32 %v351, 0.0
        %v368 = vmax.f32 %v352, 0.0
        %v369 = vmax.f32 %v353, 0.0
        %v370 = vmax.f32 %v354, 0.0
        %v371 = vmax.f32 %v355, 0.0
        %vm372 = vcmask 64512
        %373 = vst.msk [vmem:[#allocation2] sm:$0xff] %vm372, 0.0
        %vm374 = vcmask 57344
        %375 = vst.msk [vmem:[#allocation2 + $0x8] sm:$0x1] %vm374, 0.0
        %s376 = scalar_lea.vmem [#allocation2], 272
        %377 = vst.msk [vmem:[%s376] sm:$0xff] %vm372, 0.0
        %378 = vst.msk [vmem:[%s376 + $0x8] sm:$0x1] %vm374, 0.0
        %s379 = scalar_lea.vmem [#allocation2], 16
        %vm380 = vcmask 24576
        %381 = vst.msk [vmem:[%s379] sm:$0x1] %vm380, 0.0
        %382 = vst.msk [vmem:[%s379 + $0x10] sm:$0x1] %vm380, 0.0
        %383 = vst.msk [vmem:[%s379 + $0x20] sm:$0x1] %vm380, 0.0
        %384 = vst.msk [vmem:[%s379 + $0x30] sm:$0x1] %vm380, 0.0
        %385 = vst.msk [vmem:[%s379 + $0x40] sm:$0x1] %vm380, 0.0
        %386 = vst.msk [vmem:[%s379 + $0x50] sm:$0x1] %vm380, 0.0
        %387 = vst.msk [vmem:[%s379 + $0x60] sm:$0x1] %vm380, 0.0
        %388 = vst.msk [vmem:[%s379 + $0x70] sm:$0x1] %vm380, 0.0
        %389 = vst.msk [vmem:[%s379 + $0x80] sm:$0x1] %vm380, 0.0
        %390 = vst.msk [vmem:[%s379 + $0x90] sm:$0x1] %vm380, 0.0
        %391 = vst.msk [vmem:[%s379 + $0xa0] sm:$0x1] %vm380, 0.0
        %392 = vst.msk [vmem:[%s379 + $0xb0] sm:$0x1] %vm380, 0.0
        %393 = vst.msk [vmem:[%s379 + $0xc0] sm:$0x1] %vm380, 0.0
        %394 = vst.msk [vmem:[%s379 + $0xd0] sm:$0x1] %vm380, 0.0
        %395 = vst.msk [vmem:[%s379 + $0xe0] sm:$0x1] %vm380, 0.0
        %396 = vst.msk [vmem:[%s379 + $0xf0] sm:$0x1] %vm380, 0.0
        %vm397 = vcmask 57376
        %398 = vst.msk [vmem:[%s379 + $0x8] sm:$0x1] %vm397, 0.0
        %399 = vst.msk [vmem:[%s379 + $0x18] sm:$0x1] %vm397, 0.0
        %400 = vst.msk [vmem:[%s379 + $0x28] sm:$0x1] %vm397, 0.0
        %401 = vst.msk [vmem:[%s379 + $0x38] sm:$0x1] %vm397, 0.0
        %402 = vst.msk [vmem:[%s379 + $0x48] sm:$0x1] %vm397, 0.0
        %403 = vst.msk [vmem:[%s379 + $0x58] sm:$0x1] %vm397, 0.0
        %404 = vst.msk [vmem:[%s379 + $0x68] sm:$0x1] %vm397, 0.0
        %405 = vst.msk [vmem:[%s379 + $0x78] sm:$0x1] %vm397, 0.0
        %406 = vst.msk [vmem:[%s379 + $0x88] sm:$0x1] %vm397, 0.0
        %407 = vst.msk [vmem:[%s379 + $0x98] sm:$0x1] %vm397, 0.0
        %408 = vst.msk [vmem:[%s379 + $0xa8] sm:$0x1] %vm397, 0.0
        %409 = vst.msk [vmem:[%s379 + $0xb8] sm:$0x1] %vm397, 0.0
        %410 = vst.msk [vmem:[%s379 + $0xc8] sm:$0x1] %vm397, 0.0
        %411 = vst.msk [vmem:[%s379 + $0xd8] sm:$0x1] %vm397, 0.0
        %412 = vst.msk [vmem:[%s379 + $0xe8] sm:$0x1] %vm397, 0.0
        %413 = vst.msk [vmem:[%s379 + $0xf8] sm:$0x1] %vm397, 0.0
        %430 = vrot.lane.b32.xlu0 %v356, 4
        %v431 = vpop.permute.xlu0 %430
        %432 = vrot.lane.b32.xlu0 %v357, 4
        %v433 = vpop.permute.xlu0 %432
        %434 = vrot.lane.b32.xlu0 %v358, 4
        %v435 = vpop.permute.xlu0 %434
        %436 = vrot.lane.b32.xlu0 %v359, 4
        %v437 = vpop.permute.xlu0 %436
        %438 = vrot.lane.b32.xlu0 %v360, 4
        %v439 = vpop.permute.xlu0 %438
        %440 = vrot.lane.b32.xlu0 %v361, 4
        %v441 = vpop.permute.xlu0 %440
        %442 = vrot.lane.b32.xlu0 %v362, 4
        %v443 = vpop.permute.xlu0 %442
        %444 = vrot.lane.b32.xlu0 %v363, 4
        %v445 = vpop.permute.xlu0 %444
        %446 = vrot.lane.b32.xlu0 %v364, 4
        %v447 = vpop.permute.xlu0 %446
        %448 = vrot.lane.b32.xlu0 %v365, 4
        %v449 = vpop.permute.xlu0 %448
        %450 = vrot.lane.b32.xlu0 %v366, 4
        %v451 = vpop.permute.xlu0 %450
        %452 = vrot.lane.b32.xlu0 %v367, 4
        %v453 = vpop.permute.xlu0 %452
        %454 = vrot.lane.b32.xlu0 %v368, 4
        %v455 = vpop.permute.xlu0 %454
        %456 = vrot.lane.b32.xlu0 %v369, 4
        %v457 = vpop.permute.xlu0 %456
        %458 = vrot.lane.b32.xlu0 %v370, 4
        %v459 = vpop.permute.xlu0 %458
        %460 = vrot.lane.b32.xlu0 %v371, 4
        %v461 = vpop.permute.xlu0 %460
        %vm478 = vcmask 64544
        %479 = vst.msk [vmem:[%s379] sm:$0xff] %vm478, %v431
        %480 = vst.msk [vmem:[%s379 + $0x10] sm:$0xff] %vm478, %v433
        %481 = vst.msk [vmem:[%s379 + $0x20] sm:$0xff] %vm478, %v435
        %482 = vst.msk [vmem:[%s379 + $0x30] sm:$0xff] %vm478, %v437
        %483 = vst.msk [vmem:[%s379 + $0x40] sm:$0xff] %vm478, %v439
        %484 = vst.msk [vmem:[%s379 + $0x50] sm:$0xff] %vm478, %v441
        %485 = vst.msk [vmem:[%s379 + $0x60] sm:$0xff] %vm478, %v443
        %486 = vst.msk [vmem:[%s379 + $0x70] sm:$0xff] %vm478, %v445
        %487 = vst.msk [vmem:[%s379 + $0x80] sm:$0xff] %vm478, %v447
        %488 = vst.msk [vmem:[%s379 + $0x90] sm:$0xff] %vm478, %v449
        %489 = vst.msk [vmem:[%s379 + $0xa0] sm:$0xff] %vm478, %v451
        %490 = vst.msk [vmem:[%s379 + $0xb0] sm:$0xff] %vm478, %v453
        %491 = vst.msk [vmem:[%s379 + $0xc0] sm:$0xff] %vm478, %v455
        %492 = vst.msk [vmem:[%s379 + $0xd0] sm:$0xff] %vm478, %v457
        %493 = vst.msk [vmem:[%s379 + $0xe0] sm:$0xff] %vm478, %v459
        %494 = vst.msk [vmem:[%s379 + $0xf0] sm:$0xff] %vm478, %v461
        %495 = vrot.lane.b32.xlu0 %v356, 124
        %v496 = vpop.permute.xlu0 %495
        %497 = vrot.lane.b32.xlu0 %v357, 124
        %v498 = vpop.permute.xlu0 %497
        %499 = vrot.lane.b32.xlu0 %v358, 124
        %v500 = vpop.permute.xlu0 %499
        %501 = vrot.lane.b32.xlu0 %v359, 124
        %v502 = vpop.permute.xlu0 %501
        %503 = vrot.lane.b32.xlu0 %v360, 124
        %v504 = vpop.permute.xlu0 %503
        %505 = vrot.lane.b32.xlu0 %v361, 124
        %v506 = vpop.permute.xlu0 %505
        %507 = vrot.lane.b32.xlu0 %v362, 124
        %v508 = vpop.permute.xlu0 %507
        %509 = vrot.lane.b32.xlu0 %v363, 124
        %v510 = vpop.permute.xlu0 %509
        %511 = vrot.lane.b32.xlu0 %v364, 124
        %v512 = vpop.permute.xlu0 %511
        %513 = vrot.lane.b32.xlu0 %v365, 124
        %v514 = vpop.permute.xlu0 %513
        %515 = vrot.lane.b32.xlu0 %v366, 124
        %v516 = vpop.permute.xlu0 %515
        %517 = vrot.lane.b32.xlu0 %v367, 124
        %v518 = vpop.permute.xlu0 %517
        %519 = vrot.lane.b32.xlu0 %v368, 124
        %v520 = vpop.permute.xlu0 %519
        %521 = vrot.lane.b32.xlu0 %v369, 124
        %v522 = vpop.permute.xlu0 %521
        %523 = vrot.lane.b32.xlu0 %v370, 124
        %v524 = vpop.permute.xlu0 %523
        %525 = vrot.lane.b32.xlu0 %v371, 124
        %v526 = vpop.permute.xlu0 %525
        %vm543 = vcmask 31744
        %544 = vst.msk [vmem:[%s379 + $0x1] sm:$0xff] %vm543, %v496
        %545 = vst.msk [vmem:[%s379 + $0x11] sm:$0xff] %vm543, %v498
        %546 = vst.msk [vmem:[%s379 + $0x21] sm:$0xff] %vm543, %v500
        %547 = vst.msk [vmem:[%s379 + $0x31] sm:$0xff] %vm543, %v502
        %548 = vst.msk [vmem:[%s379 + $0x41] sm:$0xff] %vm543, %v504
        %549 = vst.msk [vmem:[%s379 + $0x51] sm:$0xff] %vm543, %v506
        %550 = vst.msk [vmem:[%s379 + $0x61] sm:$0xff] %vm543, %v508
        %551 = vst.msk [vmem:[%s379 + $0x71] sm:$0xff] %vm543, %v510
        %552 = vst.msk [vmem:[%s379 + $0x81] sm:$0xff] %vm543, %v512
        %553 = vst.msk [vmem:[%s379 + $0x91] sm:$0xff] %vm543, %v514
        %554 = vst.msk [vmem:[%s379 + $0xa1] sm:$0xff] %vm543, %v516
        %555 = vst.msk [vmem:[%s379 + $0xb1] sm:$0xff] %vm543, %v518
        %556 = vst.msk [vmem:[%s379 + $0xc1] sm:$0xff] %vm543, %v520
        %557 = vst.msk [vmem:[%s379 + $0xd1] sm:$0xff] %vm543, %v522
        %558 = vst.msk [vmem:[%s379 + $0xe1] sm:$0xff] %vm543, %v524
        %559 = vst.msk [vmem:[%s379 + $0xf1] sm:$0xff] %vm543, %v526
        %v560 = vld [vmem:[#allocation2] sm:$0xff]
        %v561 = vld [vmem:[#allocation2 + $0x10] sm:$0xff]
        %v562 = vld [vmem:[#allocation2 + $0x20] sm:$0xff]
        %v563 = vld [vmem:[#allocation2 + $0x30] sm:$0xff]
        %v564 = vld [vmem:[#allocation2 + $0x40] sm:$0xff]
        %v565 = vld [vmem:[#allocation2 + $0x50] sm:$0xff]
        %v566 = vld [vmem:[#allocation2 + $0x60] sm:$0xff]
        %v567 = vld [vmem:[#allocation2 + $0x70] sm:$0xff]
        %v568 = vld [vmem:[#allocation2 + $0x80] sm:$0xff]
        %v569 = vld [vmem:[#allocation2 + $0x90] sm:$0xff]
        %v570 = vld [vmem:[#allocation2 + $0xa0] sm:$0xff]
        %v571 = vld [vmem:[#allocation2 + $0xb0] sm:$0xff]
        %v572 = vld [vmem:[#allocation2 + $0xc0] sm:$0xff]
        %v573 = vld [vmem:[#allocation2 + $0xd0] sm:$0xff]
        %v574 = vld [vmem:[#allocation2 + $0xe0] sm:$0xff]
        %v575 = vld [vmem:[#allocation2 + $0xf0] sm:$0xff]
        %v576 = vld [vmem:[#allocation2 + $0x1] sm:$0xff]
        %v577 = vld [vmem:[#allocation2 + $0x11] sm:$0xff]
        %v578 = vld [vmem:[#allocation2 + $0x21] sm:$0xff]
        %v579 = vld [vmem:[#allocation2 + $0x31] sm:$0xff]
        %v580 = vld [vmem:[#allocation2 + $0x41] sm:$0xff]
        %v581 = vld [vmem:[#allocation2 + $0x51] sm:$0xff]
        %v582 = vld [vmem:[#allocation2 + $0x61] sm:$0xff]
        %v583 = vld [vmem:[#allocation2 + $0x71] sm:$0xff]
        %v584 = vld [vmem:[#allocation2 + $0x81] sm:$0xff]
        %v585 = vld [vmem:[#allocation2 + $0x91] sm:$0xff]
        %v586 = vld [vmem:[#allocation2 + $0xa1] sm:$0xff]
        %v587 = vld [vmem:[#allocation2 + $0xb1] sm:$0xff]
        %v588 = vld [vmem:[#allocation2 + $0xc1] sm:$0xff]
        %v589 = vld [vmem:[#allocation2 + $0xd1] sm:$0xff]
        %v590 = vld [vmem:[#allocation2 + $0xe1] sm:$0xff]
        %v591 = vld [vmem:[#allocation2 + $0xf1] sm:$0xff]
        %v592 = vld [vmem:[%s379] sm:$0xff]
        %v593 = vld [vmem:[%s379 + $0x10] sm:$0xff]
        %v594 = vld [vmem:[%s379 + $0x20] sm:$0xff]
        %v595 = vld [vmem:[%s379 + $0x30] sm:$0xff]
        %v596 = vld [vmem:[%s379 + $0x40] sm:$0xff]
        %v597 = vld [vmem:[%s379 + $0x50] sm:$0xff]
        %v598 = vld [vmem:[%s379 + $0x60] sm:$0xff]
        %v599 = vld [vmem:[%s379 + $0x70] sm:$0xff]
        %v600 = vld [vmem:[%s379 + $0x80] sm:$0xff]
        %v601 = vld [vmem:[%s379 + $0x90] sm:$0xff]
        %v602 = vld [vmem:[%s379 + $0xa0] sm:$0xff]
        %v603 = vld [vmem:[%s379 + $0xb0] sm:$0xff]
        %v604 = vld [vmem:[%s379 + $0xc0] sm:$0xff]
        %v605 = vld [vmem:[%s379 + $0xd0] sm:$0xff]
        %v606 = vld [vmem:[%s379 + $0xe0] sm:$0xff]
        %v607 = vld [vmem:[%s379 + $0xf0] sm:$0xff]
        %v608 = vld [vmem:[%s379 + $0x1] sm:$0xff]
        %v609 = vld [vmem:[%s379 + $0x11] sm:$0xff]
        %v610 = vld [vmem:[%s379 + $0x21] sm:$0xff]
        %v611 = vld [vmem:[%s379 + $0x31] sm:$0xff]
        %v612 = vld [vmem:[%s379 + $0x41] sm:$0xff]
        %v613 = vld [vmem:[%s379 + $0x51] sm:$0xff]
        %v614 = vld [vmem:[%s379 + $0x61] sm:$0xff]
        %v615 = vld [vmem:[%s379 + $0x71] sm:$0xff]
        %v616 = vld [vmem:[%s379 + $0x81] sm:$0xff]
        %v617 = vld [vmem:[%s379 + $0x91] sm:$0xff]
        %v618 = vld [vmem:[%s379 + $0xa1] sm:$0xff]
        %v619 = vld [vmem:[%s379 + $0xb1] sm:$0xff]
        %v620 = vld [vmem:[%s379 + $0xc1] sm:$0xff]
        %v621 = vld [vmem:[%s379 + $0xd1] sm:$0xff]
        %v622 = vld [vmem:[%s379 + $0xe1] sm:$0xff]
        %v623 = vld [vmem:[%s379 + $0xf1] sm:$0xff]
        %s624 = scalar_lea.vmem [#allocation2], 32
        %v625 = vld [vmem:[%s624] sm:$0xff]
        %v626 = vld [vmem:[%s624 + $0x10] sm:$0xff]
        %v627 = vld [vmem:[%s624 + $0x20] sm:$0xff]
        %v628 = vld [vmem:[%s624 + $0x30] sm:$0xff]
        %v629 = vld [vmem:[%s624 + $0x40] sm:$0xff]
        %v630 = vld [vmem:[%s624 + $0x50] sm:$0xff]
        %v631 = vld [vmem:[%s624 + $0x60] sm:$0xff]
        %v632 = vld [vmem:[%s624 + $0x70] sm:$0xff]
        %v633 = vld [vmem:[%s624 + $0x80] sm:$0xff]
        %v634 = vld [vmem:[%s624 + $0x90] sm:$0xff]
        %v635 = vld [vmem:[%s624 + $0xa0] sm:$0xff]
        %v636 = vld [vmem:[%s624 + $0xb0] sm:$0xff]
        %v637 = vld [vmem:[%s624 + $0xc0] sm:$0xff]
        %v638 = vld [vmem:[%s624 + $0xd0] sm:$0xff]
        %v639 = vld [vmem:[%s624 + $0xe0] sm:$0xff]
        %v640 = vld [vmem:[%s624 + $0xf0] sm:$0xff]
        %v641 = vld [vmem:[%s624 + $0x1] sm:$0xff]
        %v642 = vld [vmem:[%s624 + $0x11] sm:$0xff]
        %v643 = vld [vmem:[%s624 + $0x21] sm:$0xff]
        %v644 = vld [vmem:[%s624 + $0x31] sm:$0xff]
        %v645 = vld [vmem:[%s624 + $0x41] sm:$0xff]
        %v646 = vld [vmem:[%s624 + $0x51] sm:$0xff]
        %v647 = vld [vmem:[%s624 + $0x61] sm:$0xff]
        %v648 = vld [vmem:[%s624 + $0x71] sm:$0xff]
        %v649 = vld [vmem:[%s624 + $0x81] sm:$0xff]
        %v650 = vld [vmem:[%s624 + $0x91] sm:$0xff]
        %v651 = vld [vmem:[%s624 + $0xa1] sm:$0xff]
        %v652 = vld [vmem:[%s624 + $0xb1] sm:$0xff]
        %v653 = vld [vmem:[%s624 + $0xc1] sm:$0xff]
        %v654 = vld [vmem:[%s624 + $0xd1] sm:$0xff]
        %v655 = vld [vmem:[%s624 + $0xe1] sm:$0xff]
        %v656 = vld [vmem:[%s624 + $0xf1] sm:$0xff]
        %673 = vrot.lane.b32.xlu0 %v576, 8
        %v674 = vpop.permute.xlu0 %673
        %675 = vrot.lane.b32.xlu0 %v577, 8
        %v676 = vpop.permute.xlu0 %675
        %677 = vrot.lane.b32.xlu0 %v578, 8
        %v678 = vpop.permute.xlu0 %677
        %679 = vrot.lane.b32.xlu0 %v579, 8
        %v680 = vpop.permute.xlu0 %679
        %681 = vrot.lane.b32.xlu0 %v580, 8
        %v682 = vpop.permute.xlu0 %681
        %683 = vrot.lane.b32.xlu0 %v581, 8
        %v684 = vpop.permute.xlu0 %683
        %685 = vrot.lane.b32.xlu0 %v582, 8
        %v686 = vpop.permute.xlu0 %685
        %687 = vrot.lane.b32.xlu0 %v583, 8
        %v688 = vpop.permute.xlu0 %687
        %689 = vrot.lane.b32.xlu0 %v584, 8
        %v690 = vpop.permute.xlu0 %689
        %691 = vrot.lane.b32.xlu0 %v585, 8
        %v692 = vpop.permute.xlu0 %691
        %693 = vrot.lane.b32.xlu0 %v586, 8
        %v694 = vpop.permute.xlu0 %693
        %695 = vrot.lane.b32.xlu0 %v587, 8
        %v696 = vpop.permute.xlu0 %695
        %697 = vrot.lane.b32.xlu0 %v588, 8
        %v698 = vpop.permute.xlu0 %697
        %699 = vrot.lane.b32.xlu0 %v589, 8
        %v700 = vpop.permute.xlu0 %699
        %701 = vrot.lane.b32.xlu0 %v590, 8
        %v702 = vpop.permute.xlu0 %701
        %703 = vrot.lane.b32.xlu0 %v591, 8
        %v704 = vpop.permute.xlu0 %703
        %737 = vrot.lane.b32.xlu0 %v592, 16
        %v738 = vpop.permute.xlu0 %737
        %739 = vrot.lane.b32.xlu0 %v593, 16
        %v740 = vpop.permute.xlu0 %739
        %741 = vrot.lane.b32.xlu0 %v594, 16
        %v742 = vpop.permute.xlu0 %741
        %743 = vrot.lane.b32.xlu0 %v595, 16
        %v744 = vpop.permute.xlu0 %743
        %745 = vrot.lane.b32.xlu0 %v596, 16
        %v746 = vpop.permute.xlu0 %745
        %747 = vrot.lane.b32.xlu0 %v597, 16
        %v748 = vpop.permute.xlu0 %747
        %749 = vrot.lane.b32.xlu0 %v598, 16
        %v750 = vpop.permute.xlu0 %749
        %751 = vrot.lane.b32.xlu0 %v599, 16
        %v752 = vpop.permute.xlu0 %751
        %753 = vrot.lane.b32.xlu0 %v600, 16
        %v754 = vpop.permute.xlu0 %753
        %755 = vrot.lane.b32.xlu0 %v601, 16
        %v756 = vpop.permute.xlu0 %755
        %757 = vrot.lane.b32.xlu0 %v602, 16
        %v758 = vpop.permute.xlu0 %757
        %759 = vrot.lane.b32.xlu0 %v603, 16
        %v760 = vpop.permute.xlu0 %759
        %761 = vrot.lane.b32.xlu0 %v604, 16
        %v762 = vpop.permute.xlu0 %761
        %763 = vrot.lane.b32.xlu0 %v605, 16
        %v764 = vpop.permute.xlu0 %763
        %765 = vrot.lane.b32.xlu0 %v606, 16
        %v766 = vpop.permute.xlu0 %765
        %767 = vrot.lane.b32.xlu0 %v607, 16
        %v768 = vpop.permute.xlu0 %767
        %801 = vrot.lane.b32.xlu0 %v608, 24
        %v802 = vpop.permute.xlu0 %801
        %803 = vrot.lane.b32.xlu0 %v609, 24
        %v804 = vpop.permute.xlu0 %803
        %805 = vrot.lane.b32.xlu0 %v610, 24
        %v806 = vpop.permute.xlu0 %805
        %807 = vrot.lane.b32.xlu0 %v611, 24
        %v808 = vpop.permute.xlu0 %807
        %809 = vrot.lane.b32.xlu0 %v612, 24
        %v810 = vpop.permute.xlu0 %809
        %811 = vrot.lane.b32.xlu0 %v613, 24
        %v812 = vpop.permute.xlu0 %811
        %813 = vrot.lane.b32.xlu0 %v614, 24
        %v814 = vpop.permute.xlu0 %813
        %815 = vrot.lane.b32.xlu0 %v615, 24
        %v816 = vpop.permute.xlu0 %815
        %817 = vrot.lane.b32.xlu0 %v616, 24
        %v818 = vpop.permute.xlu0 %817
        %819 = vrot.lane.b32.xlu0 %v617, 24
        %v820 = vpop.permute.xlu0 %819
        %821 = vrot.lane.b32.xlu0 %v618, 24
        %v822 = vpop.permute.xlu0 %821
        %823 = vrot.lane.b32.xlu0 %v619, 24
        %v824 = vpop.permute.xlu0 %823
        %825 = vrot.lane.b32.xlu0 %v620, 24
        %v826 = vpop.permute.xlu0 %825
        %827 = vrot.lane.b32.xlu0 %v621, 24
        %v828 = vpop.permute.xlu0 %827
        %829 = vrot.lane.b32.xlu0 %v622, 24
        %v830 = vpop.permute.xlu0 %829
        %831 = vrot.lane.b32.xlu0 %v623, 24
        %v832 = vpop.permute.xlu0 %831
        %865 = vrot.lane.b32.xlu0 %v625, 32
        %v866 = vpop.permute.xlu0 %865
        %867 = vrot.lane.b32.xlu0 %v626, 32
        %v868 = vpop.permute.xlu0 %867
        %869 = vrot.lane.b32.xlu0 %v627, 32
        %v870 = vpop.permute.xlu0 %869
        %871 = vrot.lane.b32.xlu0 %v628, 32
        %v872 = vpop.permute.xlu0 %871
        %873 = vrot.lane.b32.xlu0 %v629, 32
        %v874 = vpop.permute.xlu0 %873
        %875 = vrot.lane.b32.xlu0 %v630, 32
        %v876 = vpop.permute.xlu0 %875
        %877 = vrot.lane.b32.xlu0 %v631, 32
        %v878 = vpop.permute.xlu0 %877
        %879 = vrot.lane.b32.xlu0 %v632, 32
        %v880 = vpop.permute.xlu0 %879
        %881 = vrot.lane.b32.xlu0 %v633, 32
        %v882 = vpop.permute.xlu0 %881
        %883 = vrot.lane.b32.xlu0 %v634, 32
        %v884 = vpop.permute.xlu0 %883
        %885 = vrot.lane.b32.xlu0 %v635, 32
        %v886 = vpop.permute.xlu0 %885
        %887 = vrot.lane.b32.xlu0 %v636, 32
        %v888 = vpop.permute.xlu0 %887
        %889 = vrot.lane.b32.xlu0 %v637, 32
        %v890 = vpop.permute.xlu0 %889
        %891 = vrot.lane.b32.xlu0 %v638, 32
        %v892 = vpop.permute.xlu0 %891
        %893 = vrot.lane.b32.xlu0 %v639, 32
        %v894 = vpop.permute.xlu0 %893
        %895 = vrot.lane.b32.xlu0 %v640, 32
        %v896 = vpop.permute.xlu0 %895
        %929 = vrot.lane.b32.xlu0 %v641, 40
        %v930 = vpop.permute.xlu0 %929
        %931 = vrot.lane.b32.xlu0 %v642, 40
        %v932 = vpop.permute.xlu0 %931
        %933 = vrot.lane.b32.xlu0 %v643, 40
        %v934 = vpop.permute.xlu0 %933
        %935 = vrot.lane.b32.xlu0 %v644, 40
        %v936 = vpop.permute.xlu0 %935
        %937 = vrot.lane.b32.xlu0 %v645, 40
        %v938 = vpop.permute.xlu0 %937
        %939 = vrot.lane.b32.xlu0 %v646, 40
        %v940 = vpop.permute.xlu0 %939
        %941 = vrot.lane.b32.xlu0 %v647, 40
        %v942 = vpop.permute.xlu0 %941
        %943 = vrot.lane.b32.xlu0 %v648, 40
        %v944 = vpop.permute.xlu0 %943
        %945 = vrot.lane.b32.xlu0 %v649, 40
        %v946 = vpop.permute.xlu0 %945
        %947 = vrot.lane.b32.xlu0 %v650, 40
        %v948 = vpop.permute.xlu0 %947
        %949 = vrot.lane.b32.xlu0 %v651, 40
        %v950 = vpop.permute.xlu0 %949
        %951 = vrot.lane.b32.xlu0 %v652, 40
        %v952 = vpop.permute.xlu0 %951
        %953 = vrot.lane.b32.xlu0 %v653, 40
        %v954 = vpop.permute.xlu0 %953
        %955 = vrot.lane.b32.xlu0 %v654, 40
        %v956 = vpop.permute.xlu0 %955
        %957 = vrot.lane.b32.xlu0 %v655, 40
        %v958 = vpop.permute.xlu0 %957
        %959 = vrot.lane.b32.xlu0 %v656, 40
        %v960 = vpop.permute.xlu0 %959
        %v977 = vsel %vm372, %v560, %v674
        %v978 = vsel %vm372, %v561, %v676
        %v979 = vsel %vm372, %v562, %v678
        %v980 = vsel %vm372, %v563, %v680
        %v981 = vsel %vm372, %v564, %v682
        %v982 = vsel %vm372, %v565, %v684
        %v983 = vsel %vm372, %v566, %v686
        %v984 = vsel %vm372, %v567, %v688
        %v985 = vsel %vm372, %v568, %v690
        %v986 = vsel %vm372, %v569, %v692
        %v987 = vsel %vm372, %v570, %v694
        %v988 = vsel %vm372, %v571, %v696
        %v989 = vsel %vm372, %v572, %v698
        %v990 = vsel %vm372, %v573, %v700
        %v991 = vsel %vm372, %v574, %v702
        %v992 = vsel %vm372, %v575, %v704
        %vm993 = vcmask 130048
        %v994 = vsel %vm993, %v977, %v738
        %v995 = vsel %vm993, %v978, %v740
        %v996 = vsel %vm993, %v979, %v742
        %v997 = vsel %vm993, %v980, %v744
        %v998 = vsel %vm993, %v981, %v746
        %v999 = vsel %vm993, %v982, %v748
        %v1000 = vsel %vm993, %v983, %v750
        %v1001 = vsel %vm993, %v984, %v752
        %v1002 = vsel %vm993, %v985, %v754
        %v1003 = vsel %vm993, %v986, %v756
        %v1004 = vsel %vm993, %v987, %v758
        %v1005 = vsel %vm993, %v988, %v760
        %v1006 = vsel %vm993, %v989, %v762
        %v1007 = vsel %vm993, %v990, %v764
        %v1008 = vsel %vm993, %v991, %v766
        %v1009 = vsel %vm993, %v992, %v768
        %vm1010 = vcmask 195584
        %v1011 = vsel %vm1010, %v994, %v802
        %v1012 = vsel %vm1010, %v995, %v804
        %v1013 = vsel %vm1010, %v996, %v806
        %v1014 = vsel %vm1010, %v997, %v808
        %v1015 = vsel %vm1010, %v998, %v810
        %v1016 = vsel %vm1010, %v999, %v812
        %v1017 = vsel %vm1010, %v1000, %v814
        %v1018 = vsel %vm1010, %v1001, %v816
        %v1019 = vsel %vm1010, %v1002, %v818
        %v1020 = vsel %vm1010, %v1003, %v820
        %v1021 = vsel %vm1010, %v1004, %v822
        %v1022 = vsel %vm1010, %v1005, %v824
        %v1023 = vsel %vm1010, %v1006, %v826
        %v1024 = vsel %vm1010, %v1007, %v828
        %v1025 = vsel %vm1010, %v1008, %v830
        %v1026 = vsel %vm1010, %v1009, %v832
        %vm1027 = vcmask 261120
        %v1028 = vsel %vm1027, %v1011, %v866
        %v1029 = vsel %vm1027, %v1012, %v868
        %v1030 = vsel %vm1027, %v1013, %v870
        %v1031 = vsel %vm1027, %v1014, %v872
        %v1032 = vsel %vm1027, %v1015, %v874
        %v1033 = vsel %vm1027, %v1016, %v876
        %v1034 = vsel %vm1027, %v1017, %v878
        %v1035 = vsel %vm1027, %v1018, %v880
        %v1036 = vsel %vm1027, %v1019, %v882
        %v1037 = vsel %vm1027, %v1020, %v884
        %v1038 = vsel %vm1027, %v1021, %v886
        %v1039 = vsel %vm1027, %v1022, %v888
        %v1040 = vsel %vm1027, %v1023, %v890
        %v1041 = vsel %vm1027, %v1024, %v892
        %v1042 = vsel %vm1027, %v1025, %v894
        %v1043 = vsel %vm1027, %v1026, %v896
        %vm1044 = vcmask 326656
        %v1045 = vsel %vm1044, %v1028, %v930
        %v1046 = vsel %vm1044, %v1029, %v932
        %v1047 = vsel %vm1044, %v1030, %v934
        %v1048 = vsel %vm1044, %v1031, %v936
        %v1049 = vsel %vm1044, %v1032, %v938
        %v1050 = vsel %vm1044, %v1033, %v940
        %v1051 = vsel %vm1044, %v1034, %v942
        %v1052 = vsel %vm1044, %v1035, %v944
        %v1053 = vsel %vm1044, %v1036, %v946
        %v1054 = vsel %vm1044, %v1037, %v948
        %v1055 = vsel %vm1044, %v1038, %v950
        %v1056 = vsel %vm1044, %v1039, %v952
        %v1057 = vsel %vm1044, %v1040, %v954
        %v1058 = vsel %vm1044, %v1041, %v956
        %v1059 = vsel %vm1044, %v1042, %v958
        %v1060 = vsel %vm1044, %v1043, %v960
        %v1061 = vpack.c.bf16 %v1046, %v1045
        %v1062 = vpack.c.bf16 %v1048, %v1047
        %v1063 = vpack.c.bf16 %v1050, %v1049
        %v1064 = vpack.c.bf16 %v1052, %v1051
        %v1065 = vpack.c.bf16 %v1054, %v1053
        %v1066 = vpack.c.bf16 %v1056, %v1055
        %v1067 = vpack.c.bf16 %v1058, %v1057
        %v1068 = vpack.c.bf16 %v1060, %v1059
        %v1069 = vld [vmem:[%s3] sm:$0xf]
        %v1070 = vld [vmem:[%s3 + $0x4] sm:$0xf]
        %v1071 = vld [vmem:[%s3 + $0x8] sm:$0xf]
        %v1072 = vld [vmem:[%s3 + $0xc] sm:$0xf]
        %v1073 = vld [vmem:[%s3 + $0x10] sm:$0xf]
        %v1074 = vld [vmem:[%s3 + $0x14] sm:$0xf]
        %v1081 = vunpack.c.l.b16 %v1069
        %v1082 = vunpack.c.l.b16 %v1070
        %v1083 = vunpack.c.l.b16 %v1071
        %v1084 = vunpack.c.l.b16 %v1072
        %v1085 = vunpack.c.l.b16 %v1073
        %v1086 = vunpack.c.l.b16 %v1074
        %v1087 = vpack.c.b16 %v1082, %v1081
        %v1088 = vpack.c.b16 %v1084, %v1083
        %v1089 = vpack.c.b16 %v1086, %v1085
        %vm1093 = vcmask 392192
        %v1095 = vsel %vm1093, %v1061, 0
        %v1098 = vsel %vm1093, %v1062, 0
        %v1101 = vsel %vm1093, %v1063, 0
        %v1104 = vsel %vm1093, %v1064, 0
        %v1107 = vsel %vm1093, %v1065, 0
        %v1110 = vsel %vm1093, %v1066, 0
        %v1113 = vsel %vm1093, %v1067, 0
        %v1116 = vsel %vm1093, %v1068, 0
        %1118 = vmatprep.subr.bf16.mxu0 0
        %1119 = vmatpush1.bf16.msra.mxu0 %v1087
        %1120 = vmatprep.subr.bf16.mxu0 0
        %1121 = vmatpush1.bf16.msra.mxu0 %v1088
        %1122 = vmatprep.subr.bf16.mxu0 0
        %1123 = vmatpush1.bf16.msra.mxu0 %v1089
        %1124 = vmatprep.subr.bf16.mxu0 0
        %1125 = vmatpush1.bf16.msra.mxu0 0
        %1126 = vmatprep.subr.bf16.mxu0 0
        %1127 = vmatpush1.bf16.msra.mxu0 0
        %1128 = vmatprep.subr.bf16.mxu0 0
        %1129 = vmatpush1.bf16.msra.mxu0 0
        %1130 = vmatprep.subr.bf16.mxu0 0
        %1131 = vmatpush1.bf16.msra.mxu0 0
        %1132 = vmatprep.subr.bf16.mxu0 0
        %1133 = vmatpush1.bf16.msra.mxu0 0
        %1134 = vmatprep.subr.bf16.mxu0 0
        %1135 = vmatpush1.bf16.msra.mxu0 0
        %1136 = vmatprep.subr.bf16.mxu0 0
        %1137 = vmatpush1.bf16.msra.mxu0 0
        %1138 = vmatprep.subr.bf16.mxu0 0
        %1139 = vmatpush1.bf16.msra.mxu0 0
        %1140 = vmatprep.subr.bf16.mxu0 0
        %1141 = vmatpush1.bf16.msra.mxu0 0
        %1142 = vmatprep.subr.bf16.mxu0 0
        %1143 = vmatpush1.bf16.msra.mxu0 0
        %1144 = vmatprep.subr.bf16.mxu0 0
        %1145 = vmatpush1.bf16.msra.mxu0 0
        %1146 = vmatprep.subr.bf16.mxu0 0
        %1147 = vmatpush1.bf16.msra.mxu0 0
        %1148 = vmatprep.subr.bf16.mxu0 0
        %1149 = vmatpush1.bf16.msra.mxu0 0
        %1150 = vmatprep.mubr.bf16.mxu0 0
        %1151 = vmatmul.mubr.bf16.gmra.mrb[0].mxu0 %v1095
        %v1152 = vpop.f32.mrb[0].mxu0
        %v1153 = vadd.f32 0.0, %v1152
        %v1154 = vpop.f32.mrb[0].mxu0
        %v1155 = vpop.f32.mrb[0].mxu0
        %v1156 = vadd.f32 0.0, %v1155
        %v1157 = vpop.f32.mrb[0].mxu0
        %1158 = vmatprep.mubr.bf16.mxu0 0
        %1159 = vmatmul.mubr.bf16.gmra.mrb[0].mxu0 %v1098
        %v1160 = vpop.f32.mrb[0].mxu0
        %v1161 = vadd.f32 0.0, %v1160
        %v1162 = vpop.f32.mrb[0].mxu0
        %v1163 = vpop.f32.mrb[0].mxu0
        %v1164 = vadd.f32 0.0, %v1163
        %v1165 = vpop.f32.mrb[0].mxu0
        %1166 = vmatprep.mubr.bf16.mxu0 0
        %1167 = vmatmul.mubr.bf16.gmra.mrb[0].mxu0 %v1101
        %v1168 = vpop.f32.mrb[0].mxu0
        %v1169 = vadd.f32 0.0, %v1168
        %v1170 = vpop.f32.mrb[0].mxu0
        %v1171 = vpop.f32.mrb[0].mxu0
        %v1172 = vadd.f32 0.0, %v1171
        %v1173 = vpop.f32.mrb[0].mxu0
        %1174 = vmatprep.mubr.bf16.mxu0 0
        %1175 = vmatmul.mubr.bf16.gmra.mrb[0].mxu0 %v1104
        %v1176 = vpop.f32.mrb[0].mxu0
        %v1177 = vadd.f32 0.0, %v1176
        %v1178 = vpop.f32.mrb[0].mxu0
        %v1179 = vpop.f32.mrb[0].mxu0
        %v1180 = vadd.f32 0.0, %v1179
        %v1181 = vpop.f32.mrb[0].mxu0
        %1182 = vmatprep.mubr.bf16.mxu0 0
        %1183 = vmatmul.mubr.bf16.gmra.mrb[0].mxu0 %v1107
        %v1184 = vpop.f32.mrb[0].mxu0
        %v1185 = vadd.f32 0.0, %v1184
        %v1186 = vpop.f32.mrb[0].mxu0
        %v1187 = vpop.f32.mrb[0].mxu0
        %v1188 = vadd.f32 0.0, %v1187
        %v1189 = vpop.f32.mrb[0].mxu0
        %1190 = vmatprep.mubr.bf16.mxu0 0
        %1191 = vmatmul.mubr.bf16.gmra.mrb[0].mxu0 %v1110
        %v1192 = vpop.f32.mrb[0].mxu0
        %v1193 = vadd.f32 0.0, %v1192
        %v1194 = vpop.f32.mrb[0].mxu0
        %v1195 = vpop.f32.mrb[0].mxu0
        %v1196 = vadd.f32 0.0, %v1195
        %v1197 = vpop.f32.mrb[0].mxu0
        %1198 = vmatprep.mubr.bf16.mxu0 0
        %1199 = vmatmul.mubr.bf16.gmra.mrb[0].mxu0 %v1113
        %v1200 = vpop.f32.mrb[0].mxu0
        %v1201 = vadd.f32 0.0, %v1200
        %v1202 = vpop.f32.mrb[0].mxu0
        %v1203 = vpop.f32.mrb[0].mxu0
        %v1204 = vadd.f32 0.0, %v1203
        %v1205 = vpop.f32.mrb[0].mxu0
        %1206 = vmatprep.mubr.bf16.mxu0 0
        %1207 = vmatmul.mubr.bf16.gmra.mrb[0].mxu0 %v1116
        %v1208 = vpop.f32.mrb[0].mxu0
        %v1209 = vadd.f32 0.0, %v1208
        %v1210 = vpop.f32.mrb[0].mxu0
        %v1211 = vpop.f32.mrb[0].mxu0
        %v1212 = vadd.f32 0.0, %v1211
        %v1213 = vpop.f32.mrb[0].mxu0
        %1214 = vdwg.mxu0
        %v1215 = vld [vmem:[%s4] sm:$0x1]
        %v1217 = vlaneseq
        %v1218 = vshrl.u32 %v1217, 7
        %v1219 = vsub.s32 0, %v1218
        %v1220 = vrot.slane %v1215, %v1219
        %v1222 = vmul.f32 %v1153, %v1220
        %v1223 = vmul.f32 %v1156, %v1220
        %v1224 = vmul.f32 %v1161, %v1220
        %v1225 = vmul.f32 %v1164, %v1220
        %v1226 = vmul.f32 %v1169, %v1220
        %v1227 = vmul.f32 %v1172, %v1220
        %v1228 = vmul.f32 %v1177, %v1220
        %v1229 = vmul.f32 %v1180, %v1220
        %v1230 = vmul.f32 %v1185, %v1220
        %v1231 = vmul.f32 %v1188, %v1220
        %v1232 = vmul.f32 %v1193, %v1220
        %v1233 = vmul.f32 %v1196, %v1220
        %v1234 = vmul.f32 %v1201, %v1220
        %v1235 = vmul.f32 %v1204, %v1220
        %v1236 = vmul.f32 %v1209, %v1220
        %v1237 = vmul.f32 %v1212, %v1220
        %v1238 = vld [vmem:[%s5] sm:$0x1]
        %v1240 = vlaneseq
        %v1241 = vshrl.u32 %v1240, 7
        %v1242 = vsub.s32 0, %v1241
        %v1243 = vrot.slane %v1238, %v1242
        %v1245 = vadd.f32 %v1222, %v1243
        %v1246 = vadd.f32 %v1223, %v1243
        %v1247 = vadd.f32 %v1224, %v1243
        %v1248 = vadd.f32 %v1225, %v1243
        %v1249 = vadd.f32 %v1226, %v1243
        %v1250 = vadd.f32 %v1227, %v1243
        %v1251 = vadd.f32 %v1228, %v1243
        %v1252 = vadd.f32 %v1229, %v1243
        %v1253 = vadd.f32 %v1230, %v1243
        %v1254 = vadd.f32 %v1231, %v1243
        %v1255 = vadd.f32 %v1232, %v1243
        %v1256 = vadd.f32 %v1233, %v1243
        %v1257 = vadd.f32 %v1234, %v1243
        %v1258 = vadd.f32 %v1235, %v1243
        %v1259 = vadd.f32 %v1236, %v1243
        %v1260 = vadd.f32 %v1237, %v1243
        %v1261 = vmax.f32 %v1245, 0.0
        %v1262 = vmax.f32 %v1246, 0.0
        %v1263 = vmax.f32 %v1247, 0.0
        %v1264 = vmax.f32 %v1248, 0.0
        %v1265 = vmax.f32 %v1249, 0.0
        %v1266 = vmax.f32 %v1250, 0.0
        %v1267 = vmax.f32 %v1251, 0.0
        %v1268 = vmax.f32 %v1252, 0.0
        %v1269 = vmax.f32 %v1253, 0.0
        %v1270 = vmax.f32 %v1254, 0.0
        %v1271 = vmax.f32 %v1255, 0.0
        %v1272 = vmax.f32 %v1256, 0.0
        %v1273 = vmax.f32 %v1257, 0.0
        %v1274 = vmax.f32 %v1258, 0.0
        %v1275 = vmax.f32 %v1259, 0.0
        %v1276 = vmax.f32 %v1260, 0.0
        %1277 = vst.msk [vmem:[#allocation3] sm:$0xff] %vm993, 0.0
        %vm1278 = vcmask 122880
        %1279 = vst.msk [vmem:[#allocation3 + $0x8] sm:$0x1] %vm1278, 0.0
        %s1280 = scalar_lea.vmem [#allocation3], 272
        %1281 = vst.msk [vmem:[%s1280] sm:$0xff] %vm993, 0.0
        %1282 = vst.msk [vmem:[%s1280 + $0x8] sm:$0x1] %vm1278, 0.0
        %s1283 = scalar_lea.vmem [#allocation3], 16
        %1284 = vst.msk [vmem:[%s1283] sm:$0x1] %vm374, 0.0
        %1285 = vst.msk [vmem:[%s1283 + $0x10] sm:$0x1] %vm374, 0.0
        %1286 = vst.msk [vmem:[%s1283 + $0x20] sm:$0x1] %vm374, 0.0
        %1287 = vst.msk [vmem:[%s1283 + $0x30] sm:$0x1] %vm374, 0.0
        %1288 = vst.msk [vmem:[%s1283 + $0x40] sm:$0x1] %vm374, 0.0
        %1289 = vst.msk [vmem:[%s1283 + $0x50] sm:$0x1] %vm374, 0.0
        %1290 = vst.msk [vmem:[%s1283 + $0x60] sm:$0x1] %vm374, 0.0
        %1291 = vst.msk [vmem:[%s1283 + $0x70] sm:$0x1] %vm374, 0.0
        %1292 = vst.msk [vmem:[%s1283 + $0x80] sm:$0x1] %vm374, 0.0
        %1293 = vst.msk [vmem:[%s1283 + $0x90] sm:$0x1] %vm374, 0.0
        %1294 = vst.msk [vmem:[%s1283 + $0xa0] sm:$0x1] %vm374, 0.0
        %1295 = vst.msk [vmem:[%s1283 + $0xb0] sm:$0x1] %vm374, 0.0
        %1296 = vst.msk [vmem:[%s1283 + $0xc0] sm:$0x1] %vm374, 0.0
        %1297 = vst.msk [vmem:[%s1283 + $0xd0] sm:$0x1] %vm374, 0.0
        %1298 = vst.msk [vmem:[%s1283 + $0xe0] sm:$0x1] %vm374, 0.0
        %1299 = vst.msk [vmem:[%s1283 + $0xf0] sm:$0x1] %vm374, 0.0
        %vm1300 = vcmask 122944
        %1301 = vst.msk [vmem:[%s1283 + $0x8] sm:$0x1] %vm1300, 0.0
        %1302 = vst.msk [vmem:[%s1283 + $0x18] sm:$0x1] %vm1300, 0.0
        %1303 = vst.msk [vmem:[%s1283 + $0x28] sm:$0x1] %vm1300, 0.0
        %1304 = vst.msk [vmem:[%s1283 + $0x38] sm:$0x1] %vm1300, 0.0
        %1305 = vst.msk [vmem:[%s1283 + $0x48] sm:$0x1] %vm1300, 0.0
        %1306 = vst.msk [vmem:[%s1283 + $0x58] sm:$0x1] %vm1300, 0.0
        %1307 = vst.msk [vmem:[%s1283 + $0x68] sm:$0x1] %vm1300, 0.0
        %1308 = vst.msk [vmem:[%s1283 + $0x78] sm:$0x1] %vm1300, 0.0
        %1309 = vst.msk [vmem:[%s1283 + $0x88] sm:$0x1] %vm1300, 0.0
        %1310 = vst.msk [vmem:[%s1283 + $0x98] sm:$0x1] %vm1300, 0.0
        %1311 = vst.msk [vmem:[%s1283 + $0xa8] sm:$0x1] %vm1300, 0.0
        %1312 = vst.msk [vmem:[%s1283 + $0xb8] sm:$0x1] %vm1300, 0.0
        %1313 = vst.msk [vmem:[%s1283 + $0xc8] sm:$0x1] %vm1300, 0.0
        %1314 = vst.msk [vmem:[%s1283 + $0xd8] sm:$0x1] %vm1300, 0.0
        %1315 = vst.msk [vmem:[%s1283 + $0xe8] sm:$0x1] %vm1300, 0.0
        %1316 = vst.msk [vmem:[%s1283 + $0xf8] sm:$0x1] %vm1300, 0.0
        %1333 = vrot.lane.b32.xlu0 %v1261, 8
        %v1334 = vpop.permute.xlu0 %1333
        %1335 = vrot.lane.b32.xlu0 %v1262, 8
        %v1336 = vpop.permute.xlu0 %1335
        %1337 = vrot.lane.b32.xlu0 %v1263, 8
        %v1338 = vpop.permute.xlu0 %1337
        %1339 = vrot.lane.b32.xlu0 %v1264, 8
        %v1340 = vpop.permute.xlu0 %1339
        %1341 = vrot.lane.b32.xlu0 %v1265, 8
        %v1342 = vpop.permute.xlu0 %1341
        %1343 = vrot.lane.b32.xlu0 %v1266, 8
        %v1344 = vpop.permute.xlu0 %1343
        %1345 = vrot.lane.b32.xlu0 %v1267, 8
        %v1346 = vpop.permute.xlu0 %1345
        %1347 = vrot.lane.b32.xlu0 %v1268, 8
        %v1348 = vpop.permute.xlu0 %1347
        %1349 = vrot.lane.b32.xlu0 %v1269, 8
        %v1350 = vpop.permute.xlu0 %1349
        %1351 = vrot.lane.b32.xlu0 %v1270, 8
        %v1352 = vpop.permute.xlu0 %1351
        %1353 = vrot.lane.b32.xlu0 %v1271, 8
        %v1354 = vpop.permute.xlu0 %1353
        %1355 = vrot.lane.b32.xlu0 %v1272, 8
        %v1356 = vpop.permute.xlu0 %1355
        %1357 = vrot.lane.b32.xlu0 %v1273, 8
        %v1358 = vpop.permute.xlu0 %1357
        %1359 = vrot.lane.b32.xlu0 %v1274, 8
        %v1360 = vpop.permute.xlu0 %1359
        %1361 = vrot.lane.b32.xlu0 %v1275, 8
        %v1362 = vpop.permute.xlu0 %1361
        %1363 = vrot.lane.b32.xlu0 %v1276, 8
        %v1364 = vpop.permute.xlu0 %1363
        %vm1381 = vcmask 130112
        %1382 = vst.msk [vmem:[%s1283] sm:$0xff] %vm1381, %v1334
        %1383 = vst.msk [vmem:[%s1283 + $0x10] sm:$0xff] %vm1381, %v1336
        %1384 = vst.msk [vmem:[%s1283 + $0x20] sm:$0xff] %vm1381, %v1338
        %1385 = vst.msk [vmem:[%s1283 + $0x30] sm:$0xff] %vm1381, %v1340
        %1386 = vst.msk [vmem:[%s1283 + $0x40] sm:$0xff] %vm1381, %v1342
        %1387 = vst.msk [vmem:[%s1283 + $0x50] sm:$0xff] %vm1381, %v1344
        %1388 = vst.msk [vmem:[%s1283 + $0x60] sm:$0xff] %vm1381, %v1346
        %1389 = vst.msk [vmem:[%s1283 + $0x70] sm:$0xff] %vm1381, %v1348
        %1390 = vst.msk [vmem:[%s1283 + $0x80] sm:$0xff] %vm1381, %v1350
        %1391 = vst.msk [vmem:[%s1283 + $0x90] sm:$0xff] %vm1381, %v1352
        %1392 = vst.msk [vmem:[%s1283 + $0xa0] sm:$0xff] %vm1381, %v1354
        %1393 = vst.msk [vmem:[%s1283 + $0xb0] sm:$0xff] %vm1381, %v1356
        %1394 = vst.msk [vmem:[%s1283 + $0xc0] sm:$0xff] %vm1381, %v1358
        %1395 = vst.msk [vmem:[%s1283 + $0xd0] sm:$0xff] %vm1381, %v1360
        %1396 = vst.msk [vmem:[%s1283 + $0xe0] sm:$0xff] %vm1381, %v1362
        %1397 = vst.msk [vmem:[%s1283 + $0xf0] sm:$0xff] %vm1381, %v1364
        %1398 = vrot.lane.b32.xlu0 %v1261, 120
        %v1399 = vpop.permute.xlu0 %1398
        %1400 = vrot.lane.b32.xlu0 %v1262, 120
        %v1401 = vpop.permute.xlu0 %1400
        %1402 = vrot.lane.b32.xlu0 %v1263, 120
        %v1403 = vpop.permute.xlu0 %1402
        %1404 = vrot.lane.b32.xlu0 %v1264, 120
        %v1405 = vpop.permute.xlu0 %1404
        %1406 = vrot.lane.b32.xlu0 %v1265, 120
        %v1407 = vpop.permute.xlu0 %1406
        %1408 = vrot.lane.b32.xlu0 %v1266, 120
        %v1409 = vpop.permute.xlu0 %1408
        %1410 = vrot.lane.b32.xlu0 %v1267, 120
        %v1411 = vpop.permute.xlu0 %1410
        %1412 = vrot.lane.b32.xlu0 %v1268, 120
        %v1413 = vpop.permute.xlu0 %1412
        %1414 = vrot.lane.b32.xlu0 %v1269, 120
        %v1415 = vpop.permute.xlu0 %1414
        %1416 = vrot.lane.b32.xlu0 %v1270, 120
        %v1417 = vpop.permute.xlu0 %1416
        %1418 = vrot.lane.b32.xlu0 %v1271, 120
        %v1419 = vpop.permute.xlu0 %1418
        %1420 = vrot.lane.b32.xlu0 %v1272, 120
        %v1421 = vpop.permute.xlu0 %1420
        %1422 = vrot.lane.b32.xlu0 %v1273, 120
        %v1423 = vpop.permute.xlu0 %1422
        %1424 = vrot.lane.b32.xlu0 %v1274, 120
        %v1425 = vpop.permute.xlu0 %1424
        %1426 = vrot.lane.b32.xlu0 %v1275, 120
        %v1427 = vpop.permute.xlu0 %1426
        %1428 = vrot.lane.b32.xlu0 %v1276, 120
        %v1429 = vpop.permute.xlu0 %1428
        %1446 = vst.msk [vmem:[%s1283 + $0x1] sm:$0xff] %vm372, %v1399
        %1447 = vst.msk [vmem:[%s1283 + $0x11] sm:$0xff] %vm372, %v1401
        %1448 = vst.msk [vmem:[%s1283 + $0x21] sm:$0xff] %vm372, %v1403
        %1449 = vst.msk [vmem:[%s1283 + $0x31] sm:$0xff] %vm372, %v1405
        %1450 = vst.msk [vmem:[%s1283 + $0x41] sm:$0xff] %vm372, %v1407
        %1451 = vst.msk [vmem:[%s1283 + $0x51] sm:$0xff] %vm372, %v1409
        %1452 = vst.msk [vmem:[%s1283 + $0x61] sm:$0xff] %vm372, %v1411
        %1453 = vst.msk [vmem:[%s1283 + $0x71] sm:$0xff] %vm372, %v1413
        %1454 = vst.msk [vmem:[%s1283 + $0x81] sm:$0xff] %vm372, %v1415
        %1455 = vst.msk [vmem:[%s1283 + $0x91] sm:$0xff] %vm372, %v1417
        %1456 = vst.msk [vmem:[%s1283 + $0xa1] sm:$0xff] %vm372, %v1419
        %1457 = vst.msk [vmem:[%s1283 + $0xb1] sm:$0xff] %vm372, %v1421
        %1458 = vst.msk [vmem:[%s1283 + $0xc1] sm:$0xff] %vm372, %v1423
        %1459 = vst.msk [vmem:[%s1283 + $0xd1] sm:$0xff] %vm372, %v1425
        %1460 = vst.msk [vmem:[%s1283 + $0xe1] sm:$0xff] %vm372, %v1427
        %1461 = vst.msk [vmem:[%s1283 + $0xf1] sm:$0xff] %vm372, %v1429
        %v1462 = vld [vmem:[#allocation3] sm:$0xff]
        %v1463 = vld [vmem:[#allocation3 + $0x8] sm:$0x1]
        %v1464 = vld [vmem:[#allocation3 + $0x10] sm:$0xff]
        %v1465 = vld [vmem:[#allocation3 + $0x18] sm:$0x1]
        %v1466 = vld [vmem:[#allocation3 + $0x20] sm:$0xff]
        %v1467 = vld [vmem:[#allocation3 + $0x28] sm:$0x1]
        %v1468 = vld [vmem:[#allocation3 + $0x30] sm:$0xff]
        %v1469 = vld [vmem:[#allocation3 + $0x38] sm:$0x1]
        %v1470 = vld [vmem:[#allocation3 + $0x40] sm:$0xff]
        %v1471 = vld [vmem:[#allocation3 + $0x48] sm:$0x1]
        %v1472 = vld [vmem:[#allocation3 + $0x50] sm:$0xff]
        %v1473 = vld [vmem:[#allocation3 + $0x58] sm:$0x1]
        %v1474 = vld [vmem:[#allocation3 + $0x60] sm:$0xff]
        %v1475 = vld [vmem:[#allocation3 + $0x68] sm:$0x1]
        %v1476 = vld [vmem:[#allocation3 + $0x70] sm:$0xff]
        %v1477 = vld [vmem:[#allocation3 + $0x78] sm:$0x1]
        %v1478 = vld [vmem:[#allocation3 + $0x80] sm:$0xff]
        %v1479 = vld [vmem:[#allocation3 + $0x88] sm:$0x1]
        %v1480 = vld [vmem:[#allocation3 + $0x90] sm:$0xff]
        %v1481 = vld [vmem:[#allocation3 + $0x98] sm:$0x1]
        %v1482 = vld [vmem:[#allocation3 + $0xa0] sm:$0xff]
        %v1483 = vld [vmem:[#allocation3 + $0xa8] sm:$0x1]
        %v1484 = vld [vmem:[#allocation3 + $0xb0] sm:$0xff]
        %v1485 = vld [vmem:[#allocation3 + $0xb8] sm:$0x1]
        %v1486 = vld [vmem:[#allocation3 + $0xc0] sm:$0xff]
        %v1487 = vld [vmem:[#allocation3 + $0xc8] sm:$0x1]
        %v1488 = vld [vmem:[#allocation3 + $0xd0] sm:$0xff]
        %v1489 = vld [vmem:[#allocation3 + $0xd8] sm:$0x1]
        %v1490 = vld [vmem:[#allocation3 + $0xe0] sm:$0xff]
        %v1491 = vld [vmem:[#allocation3 + $0xe8] sm:$0x1]
        %v1492 = vld [vmem:[#allocation3 + $0xf0] sm:$0xff]
        %v1493 = vld [vmem:[#allocation3 + $0xf8] sm:$0x1]
        %v1494 = vld [vmem:[#allocation3 + $0x100] sm:$0xff]
        %v1495 = vld [vmem:[#allocation3 + $0x108] sm:$0x1]
        %vm1512 = vcmask 1046528
        %v1513 = vrot.slane %v1462, 1
        %v1514 = vrot.slane %v1463, 1
        %v1515 = vsel %vm1512, %v1513, %v1514
        %v1516 = vrot.slane %v1466, 1
        %v1517 = vrot.slane %v1467, 1
        %v1518 = vsel %vm1512, %v1516, %v1517
        %v1519 = vrot.slane %v1470, 1
        %v1520 = vrot.slane %v1471, 1
        %v1521 = vsel %vm1512, %v1519, %v1520
        %v1522 = vrot.slane %v1474, 1
        %v1523 = vrot.slane %v1475, 1
        %v1524 = vsel %vm1512, %v1522, %v1523
        %v1525 = vrot.slane %v1478, 1
        %v1526 = vrot.slane %v1479, 1
        %v1527 = vsel %vm1512, %v1525, %v1526
        %v1528 = vrot.slane %v1482, 1
        %v1529 = vrot.slane %v1483, 1
        %v1530 = vsel %vm1512, %v1528, %v1529
        %v1531 = vrot.slane %v1486, 1
        %v1532 = vrot.slane %v1487, 1
        %v1533 = vsel %vm1512, %v1531, %v1532
        %v1534 = vrot.slane %v1490, 1
        %v1535 = vrot.slane %v1491, 1
        %v1536 = vsel %vm1512, %v1534, %v1535
        %1537 = vrot.lane.b32.xlu0 %v1515, 16
        %v1538 = vpop.permute.xlu0 %1537
        %1539 = vrot.lane.b32.xlu0 %v1518, 16
        %v1540 = vpop.permute.xlu0 %1539
        %1541 = vrot.lane.b32.xlu0 %v1521, 16
        %v1542 = vpop.permute.xlu0 %1541
        %1543 = vrot.lane.b32.xlu0 %v1524, 16
        %v1544 = vpop.permute.xlu0 %1543
        %1545 = vrot.lane.b32.xlu0 %v1527, 16
        %v1546 = vpop.permute.xlu0 %1545
        %1547 = vrot.lane.b32.xlu0 %v1530, 16
        %v1548 = vpop.permute.xlu0 %1547
        %1549 = vrot.lane.b32.xlu0 %v1533, 16
        %v1550 = vpop.permute.xlu0 %1549
        %1551 = vrot.lane.b32.xlu0 %v1536, 16
        %v1552 = vpop.permute.xlu0 %1551
        %1569 = vrot.lane.b32.xlu0 %v1464, 32
        %v1570 = vpop.permute.xlu0 %1569
        %1571 = vrot.lane.b32.xlu0 %v1468, 32
        %v1572 = vpop.permute.xlu0 %1571
        %1573 = vrot.lane.b32.xlu0 %v1472, 32
        %v1574 = vpop.permute.xlu0 %1573
        %1575 = vrot.lane.b32.xlu0 %v1476, 32
        %v1576 = vpop.permute.xlu0 %1575
        %1577 = vrot.lane.b32.xlu0 %v1480, 32
        %v1578 = vpop.permute.xlu0 %1577
        %1579 = vrot.lane.b32.xlu0 %v1484, 32
        %v1580 = vpop.permute.xlu0 %1579
        %1581 = vrot.lane.b32.xlu0 %v1488, 32
        %v1582 = vpop.permute.xlu0 %1581
        %1583 = vrot.lane.b32.xlu0 %v1492, 32
        %v1584 = vpop.permute.xlu0 %1583
        %v1601 = vrot.slane %v1464, 1
        %v1602 = vrot.slane %v1465, 1
        %v1603 = vsel %vm1512, %v1601, %v1602
        %v1604 = vrot.slane %v1468, 1
        %v1605 = vrot.slane %v1469, 1
        %v1606 = vsel %vm1512, %v1604, %v1605
        %v1607 = vrot.slane %v1472, 1
        %v1608 = vrot.slane %v1473, 1
        %v1609 = vsel %vm1512, %v1607, %v1608
        %v1610 = vrot.slane %v1476, 1
        %v1611 = vrot.slane %v1477, 1
        %v1612 = vsel %vm1512, %v1610, %v1611
        %v1613 = vrot.slane %v1480, 1
        %v1614 = vrot.slane %v1481, 1
        %v1615 = vsel %vm1512, %v1613, %v1614
        %v1616 = vrot.slane %v1484, 1
        %v1617 = vrot.slane %v1485, 1
        %v1618 = vsel %vm1512, %v1616, %v1617
        %v1619 = vrot.slane %v1488, 1
        %v1620 = vrot.slane %v1489, 1
        %v1621 = vsel %vm1512, %v1619, %v1620
        %v1622 = vrot.slane %v1492, 1
        %v1623 = vrot.slane %v1493, 1
        %v1624 = vsel %vm1512, %v1622, %v1623
        %1625 = vrot.lane.b32.xlu0 %v1603, 48
        %v1626 = vpop.permute.xlu0 %1625
        %1627 = vrot.lane.b32.xlu0 %v1606, 48
        %v1628 = vpop.permute.xlu0 %1627
        %1629 = vrot.lane.b32.xlu0 %v1609, 48
        %v1630 = vpop.permute.xlu0 %1629
        %1631 = vrot.lane.b32.xlu0 %v1612, 48
        %v1632 = vpop.permute.xlu0 %1631
        %1633 = vrot.lane.b32.xlu0 %v1615, 48
        %v1634 = vpop.permute.xlu0 %1633
        %1635 = vrot.lane.b32.xlu0 %v1618, 48
        %v1636 = vpop.permute.xlu0 %1635
        %1637 = vrot.lane.b32.xlu0 %v1621, 48
        %v1638 = vpop.permute.xlu0 %1637
        %1639 = vrot.lane.b32.xlu0 %v1624, 48
        %v1640 = vpop.permute.xlu0 %1639
        %1650 = vrot.lane.b32.xlu0 %v1466, 64
        %v1651 = vpop.permute.xlu0 %1650
        %1652 = vrot.lane.b32.xlu0 %v1470, 64
        %v1653 = vpop.permute.xlu0 %1652
        %1654 = vrot.lane.b32.xlu0 %v1474, 64
        %v1655 = vpop.permute.xlu0 %1654
        %1656 = vrot.lane.b32.xlu0 %v1478, 64
        %v1657 = vpop.permute.xlu0 %1656
        %1658 = vrot.lane.b32.xlu0 %v1482, 64
        %v1659 = vpop.permute.xlu0 %1658
        %1660 = vrot.lane.b32.xlu0 %v1486, 64
        %v1661 = vpop.permute.xlu0 %1660
        %1662 = vrot.lane.b32.xlu0 %v1490, 64
        %v1663 = vpop.permute.xlu0 %1662
        %1664 = vrot.lane.b32.xlu0 %v1494, 64
        %v1665 = vpop.permute.xlu0 %1664
        %v1675 = vrot.slane %v1494, 1
        %v1676 = vrot.slane %v1495, 1
        %v1677 = vsel %vm1512, %v1675, %v1676
        %1678 = vrot.lane.b32.xlu0 %v1518, 80
        %v1679 = vpop.permute.xlu0 %1678
        %1680 = vrot.lane.b32.xlu0 %v1521, 80
        %v1681 = vpop.permute.xlu0 %1680
        %1682 = vrot.lane.b32.xlu0 %v1524, 80
        %v1683 = vpop.permute.xlu0 %1682
        %1684 = vrot.lane.b32.xlu0 %v1527, 80
        %v1685 = vpop.permute.xlu0 %1684
        %1686 = vrot.lane.b32.xlu0 %v1530, 80
        %v1687 = vpop.permute.xlu0 %1686
        %1688 = vrot.lane.b32.xlu0 %v1533, 80
        %v1689 = vpop.permute.xlu0 %1688
        %1690 = vrot.lane.b32.xlu0 %v1536, 80
        %v1691 = vpop.permute.xlu0 %1690
        %1692 = vrot.lane.b32.xlu0 %v1677, 80
        %v1693 = vpop.permute.xlu0 %1692
        %v1702 = vsel %vm993, %v1462, %v1538
        %v1703 = vsel %vm993, %v1466, %v1540
        %v1704 = vsel %vm993, %v1470, %v1542
        %v1705 = vsel %vm993, %v1474, %v1544
        %v1706 = vsel %vm993, %v1478, %v1546
        %v1707 = vsel %vm993, %v1482, %v1548
        %v1708 = vsel %vm993, %v1486, %v1550
        %v1709 = vsel %vm993, %v1490, %v1552
        %v1710 = vsel %vm1027, %v1702, %v1570
        %v1711 = vsel %vm1027, %v1703, %v1572
        %v1712 = vsel %vm1027, %v1704, %v1574
        %v1713 = vsel %vm1027, %v1705, %v1576
        %v1714 = vsel %vm1027, %v1706, %v1578
        %v1715 = vsel %vm1027, %v1707, %v1580
        %v1716 = vsel %vm1027, %v1708, %v1582
        %v1717 = vsel %vm1027, %v1709, %v1584
        %v1718 = vsel %vm1093, %v1710, %v1626
        %v1719 = vsel %vm1093, %v1711, %v1628
        %v1720 = vsel %vm1093, %v1712, %v1630
        %v1721 = vsel %vm1093, %v1713, %v1632
        %v1722 = vsel %vm1093, %v1714, %v1634
        %v1723 = vsel %vm1093, %v1715, %v1636
        %v1724 = vsel %vm1093, %v1716, %v1638
        %v1725 = vsel %vm1093, %v1717, %v1640
        %vm1726 = vcmask 523264
        %v1727 = vsel %vm1726, %v1718, %v1651
        %v1728 = vsel %vm1726, %v1719, %v1653
        %v1729 = vsel %vm1726, %v1720, %v1655
        %v1730 = vsel %vm1726, %v1721, %v1657
        %v1731 = vsel %vm1726, %v1722, %v1659
        %v1732 = vsel %vm1726, %v1723, %v1661
        %v1733 = vsel %vm1726, %v1724, %v1663
        %v1734 = vsel %vm1726, %v1725, %v1665
        %vm1735 = vcmask 654336
        %v1736 = vsel %vm1735, %v1727, %v1679
        %v1737 = vsel %vm1735, %v1728, %v1681
        %v1738 = vsel %vm1735, %v1729, %v1683
        %v1739 = vsel %vm1735, %v1730, %v1685
        %v1740 = vsel %vm1735, %v1731, %v1687
        %v1741 = vsel %vm1735, %v1732, %v1689
        %v1742 = vsel %vm1735, %v1733, %v1691
        %v1743 = vsel %vm1735, %v1734, %v1693
        %v1744 = vpack.c.bf16 %v1737, %v1736
        %v1745 = vpack.c.bf16 %v1739, %v1738
        %v1746 = vpack.c.bf16 %v1741, %v1740
        %v1747 = vpack.c.bf16 %v1743, %v1742
        %v1748 = vld [vmem:[%s6] sm:$0xf]
        %v1749 = vld [vmem:[%s6 + $0x4] sm:$0xf]
        %v1750 = vld [vmem:[%s6 + $0x8] sm:$0xf]
        %v1751 = vld [vmem:[%s6 + $0xc] sm:$0xf]
        %v1752 = vld [vmem:[%s6 + $0x10] sm:$0xf]
        %v1753 = vld [vmem:[%s6 + $0x14] sm:$0xf]
        %v1754 = vld [vmem:[%s6 + $0x18] sm:$0xf]
        %v1755 = vld [vmem:[%s6 + $0x1c] sm:$0xf]
        %v1756 = vld [vmem:[%s6 + $0x20] sm:$0xf]
        %v1757 = vld [vmem:[%s6 + $0x24] sm:$0xf]
        %v1758 = vld [vmem:[%s6 + $0x28] sm:$0xf]
        %v1759 = vld [vmem:[%s6 + $0x2c] sm:$0xf]
        %v1772 = vunpack.c.l.b16 %v1748
        %v1773 = vunpack.c.l.b16 %v1749
        %v1774 = vunpack.c.l.b16 %v1750
        %v1775 = vunpack.c.l.b16 %v1751
        %v1776 = vunpack.c.l.b16 %v1752
        %v1777 = vunpack.c.l.b16 %v1753
        %v1778 = vunpack.c.l.b16 %v1754
        %v1779 = vunpack.c.l.b16 %v1755
        %v1780 = vunpack.c.l.b16 %v1756
        %v1781 = vunpack.c.l.b16 %v1757
        %v1782 = vunpack.c.l.b16 %v1758
        %v1783 = vunpack.c.l.b16 %v1759
        %v1784 = vpack.c.b16 %v1773, %v1772
        %v1785 = vpack.c.b16 %v1775, %v1774
        %v1786 = vpack.c.b16 %v1777, %v1776
        %v1787 = vpack.c.b16 %v1779, %v1778
        %v1788 = vpack.c.b16 %v1781, %v1780
        %v1789 = vpack.c.b16 %v1783, %v1782
        %vm1796 = vcmask 785408
        %v1798 = vsel %vm1796, %v1744, 0
        %v1801 = vsel %vm1796, %v1745, 0
        %v1804 = vsel %vm1796, %v1746, 0
        %v1807 = vsel %vm1796, %v1747, 0
        %1809 = vmatprep.subr.bf16.mxu0 0
        %1810 = vmatpush1.bf16.msra.mxu0 %v1784
        %1811 = vmatprep.subr.bf16.mxu0 0
        %1812 = vmatpush1.bf16.msra.mxu0 %v1785
        %1813 = vmatprep.subr.bf16.mxu0 0
        %1814 = vmatpush1.bf16.msra.mxu0 %v1786
        %1815 = vmatprep.subr.bf16.mxu0 0
        %1816 = vmatpush1.bf16.msra.mxu0 %v1787
        %1817 = vmatprep.subr.bf16.mxu0 0
        %1818 = vmatpush1.bf16.msra.mxu0 %v1788
        %1819 = vmatprep.subr.bf16.mxu0 0
        %1820 = vmatpush1.bf16.msra.mxu0 %v1789
        %1821 = vmatprep.subr.bf16.mxu0 0
        %1822 = vmatpush1.bf16.msra.mxu0 0
        %1823 = vmatprep.subr.bf16.mxu0 0
        %1824 = vmatpush1.bf16.msra.mxu0 0
        %1825 = vmatprep.subr.bf16.mxu0 0
        %1826 = vmatpush1.bf16.msra.mxu0 0
        %1827 = vmatprep.subr.bf16.mxu0 0
        %1828 = vmatpush1.bf16.msra.mxu0 0
        %1829 = vmatprep.subr.bf16.mxu0 0
        %1830 = vmatpush1.bf16.msra.mxu0 0
        %1831 = vmatprep.subr.bf16.mxu0 0
        %1832 = vmatpush1.bf16.msra.mxu0 0
        %1833 = vmatprep.subr.bf16.mxu0 0
        %1834 = vmatpush1.bf16.msra.mxu0 0
        %1835 = vmatprep.subr.bf16.mxu0 0
        %1836 = vmatpush1.bf16.msra.mxu0 0
        %1837 = vmatprep.subr.bf16.mxu0 0
        %1838 = vmatpush1.bf16.msra.mxu0 0
        %1839 = vmatprep.subr.bf16.mxu0 0
        %1840 = vmatpush1.bf16.msra.mxu0 0
        %1841 = vmatprep.mubr.bf16.mxu0 0
        %1842 = vmatmul.mubr.bf16.gmra.mrb[0].mxu0 %v1798
        %v1843 = vpop.f32.mrb[0].mxu0
        %v1844 = vadd.f32 0.0, %v1843
        %v1845 = vpop.f32.mrb[0].mxu0
        %v1846 = vpop.f32.mrb[0].mxu0
        %v1847 = vadd.f32 0.0, %v1846
        %v1848 = vpop.f32.mrb[0].mxu0
        %1849 = vmatprep.mubr.bf16.mxu0 0
        %1850 = vmatmul.mubr.bf16.gmra.mrb[0].mxu0 %v1801
        %v1851 = vpop.f32.mrb[0].mxu0
        %v1852 = vadd.f32 0.0, %v1851
        %v1853 = vpop.f32.mrb[0].mxu0
        %v1854 = vpop.f32.mrb[0].mxu0
        %v1855 = vadd.f32 0.0, %v1854
        %v1856 = vpop.f32.mrb[0].mxu0
        %1857 = vmatprep.mubr.bf16.mxu0 0
        %1858 = vmatmul.mubr.bf16.gmra.mrb[0].mxu0 %v1804
        %v1859 = vpop.f32.mrb[0].mxu0
        %v1860 = vadd.f32 0.0, %v1859
        %v1861 = vpop.f32.mrb[0].mxu0
        %v1862 = vpop.f32.mrb[0].mxu0
        %v1863 = vadd.f32 0.0, %v1862
        %v1864 = vpop.f32.mrb[0].mxu0
        %1865 = vmatprep.mubr.bf16.mxu0 0
        %1866 = vmatmul.mubr.bf16.gmra.mrb[0].mxu0 %v1807
        %v1867 = vpop.f32.mrb[0].mxu0
        %v1868 = vadd.f32 0.0, %v1867
        %v1869 = vpop.f32.mrb[0].mxu0
        %v1870 = vpop.f32.mrb[0].mxu0
        %v1871 = vadd.f32 0.0, %v1870
        %v1872 = vpop.f32.mrb[0].mxu0
        %1873 = vdwg.mxu0
        %1874 = vst.msk [vmem:[%s271] sm:$0xff] %vm372, %v1844
        %1875 = vst.msk [vmem:[%s271 + $0x8] sm:$0xff] %vm372, %v1847
        %1876 = vst.msk [vmem:[%s271 + $0x10] sm:$0xff] %vm372, %v1852
        %1877 = vst.msk [vmem:[%s271 + $0x18] sm:$0xff] %vm372, %v1855
        %1878 = vst.msk [vmem:[%s271 + $0x20] sm:$0xff] %vm372, %v1860
        %1879 = vst.msk [vmem:[%s271 + $0x28] sm:$0xff] %vm372, %v1863
        %1880 = vst.msk [vmem:[%s271 + $0x30] sm:$0xff] %vm372, %v1868
        %1881 = vst.msk [vmem:[%s271 + $0x38] sm:$0xff] %vm372, %v1871
        %s1882 = sand.u32 %s181, 1
        %s1883 = scalar_lea.sflag [#allocation5], %s1882
        %s1884 = sand.u32 %s181, 1
        %s1885 = smul.addr %s1884, 64
        %s1886 = scalar_lea.vmem [#allocation4], %s1885
        // Predicated region
        $region49: #{tpu_custom_call.1} parent=47 // pred_check
          %p1887 = pneg %p191
        $region50: #{tpu_custom_call.1} parent=47 // pred_check_branch
          %1889 = sbr.rel (%p1887) target = $region52
        $region51: #{tpu_custom_call.1} parent=47 // pred_region
          %s1891 = ssub.s32 1024, 1024
          %1892 = vsyncadd %s1883, %s1891
          %s1893 = smul.addr %s21, 8
          %s1894 = smul.addr %s1893, 128
          %s1895 = scalar_lea.hbm %s7, %s1894
          %s1896 = sshll.u32 %s1886, 4
          %s1897 = int_to_ptr.vmem [resolvable:$true] %s1896
          %1902 = dma.vmem_to_hbm [thread:$0]  %s1897, 1024, %s1895, %s1883, 128, 128, 8
        $region52: #{tpu_custom_call.1} parent=47 // pred_fallthru
          _
      $region48: #{tpu_custom_call.1} parent=5 // pred_fallthru
        _
      %p1903 = scmp.le.s32.totalorder 2, %s16
      // Predicated region
      $region53: #{tpu_custom_call.1} parent=5 // pred_check
        %p1904 = pneg %p1903
      $region54: #{tpu_custom_call.1} parent=5 // pred_check_branch
        %1906 = sbr.rel (%p1904) target = $region56
      $region55: #{tpu_custom_call.1} parent=5 // pred_region
        %s1907 = ssub.s32 %s16, 2
        // Predicated region
        $region57: #{tpu_custom_call.1} parent=55 // pred_check
          %p1908 = pneg %p197
        $region58: #{tpu_custom_call.1} parent=55 // pred_check_branch
          %1910 = sbr.rel (%p1908) target = $region60
        $region59: #{tpu_custom_call.1} parent=55 // pred_region
          %s1911 = sand.u32 %s182, 1
          %s1912 = scalar_lea.sflag [#allocation5], %s1911
          %s1913 = sand.u32 %s182, 1
          %s1914 = smul.addr %s1913, 64
          %s1915 = scalar_lea.vmem [#allocation4], %s1914
          %1916 = dma.done %s1912, 1024
        $region60: #{tpu_custom_call.1} parent=55 // pred_fallthru
          _
      $region56: #{tpu_custom_call.1} parent=5 // pred_fallthru
        _
    $region6: #{tpu_custom_call.1} parent=1 // loop_footer
      %s20 = sadd.s32 1, %s16
    $region7: #{tpu_custom_call.1} parent=1 // loop_footer_branch
      %15 = sbr.rel target = $region3
    $region8: #{tpu_custom_call.1} parent=1 // loop_exit
      _
    %1917 = vsyncpa [#allocation5], 1
    %s1918 = scalar_lea.sflag [#allocation5], 1
    %1919 = vsyncpa %s1918, 1

</llo_original>
